<compile_context>
chip_gen: v6e
topology: v6e:2x2x1
jax: 0.10.0
libtpu: 0.0.40
codegen_flags: <defaults>
</compile_context>

<pallas_src>
import functools

import jax
import jax.numpy as jnp
from jax.experimental import pallas as pl
from jax.experimental.pallas import tpu as pltpu


# ---------------------------------------------------------------------------
# Fused kernel: whole Conv1DNet forward for one batch tile per grid step.
# ---------------------------------------------------------------------------
def _fused_conv1dnet_kernel(
    x_ref,        # [TB, S]              input signal tile (C_in == 1)
    w0_ref,       # [W, K]      f32      first-layer weights, w0[c, k]
    wmid_ref,     # [max(n_mid,1), W, KW_PAD]  im2col middle weights (compute dtype)
    wlast_ref,    # [W, K]      f32      last-layer weights, wL[c, k]
    bias_ref,     # [W, depth]  f32      per-layer bias columns
    o_ref,        # [TB, S]              output tile (C_out == 1)
    x_scr,        # VMEM [1, S+2*PAD]    zero-padded input row
    act_a,        # VMEM [W, S+2*PAD]    activations (ping)
    act_b,        # VMEM [W, S+2*PAD]    activations (pong)
    col,          # VMEM [KW_PAD, S]     im2col buffer (compute dtype)
    *, kernel_size, seq_len, width, n_mid, batch_tile, compute_dtype,
):
    K, S, W = kernel_size, seq_len, width
    PAD = K // 2
    KW = K * W
    f32 = jnp.float32

    # ---- in-VMEM "same" padding: zero the halo columns once per grid step ----
    x_scr[:, :PAD] = jnp.zeros((1, PAD), f32)
    x_scr[:, PAD + S:] = jnp.zeros((1, PAD), f32)
    for act in (act_a, act_b):
        act[:, :PAD] = jnp.zeros((W, PAD), f32)
        act[:, PAD + S:] = jnp.zeros((W, PAD), f32)
    # Zero the contraction-padding rows of the im2col buffer (keeps the MXU
    # contraction a multiple of 128; the extra rows contribute exact zeros).
    if col.shape[0] > KW:
        col[KW:, :] = jnp.zeros((col.shape[0] - KW, S), compute_dtype)

    w0 = w0_ref[...]      # [W, K] f32
    wl = wlast_ref[...]   # [W, K] f32

    for b in range(batch_tile):  # static unroll: amortize per-step overhead
        # ---- layer 0 (1 -> W): VPU broadcast-FMA (an MXU matmul with a
        #      contraction of 1 would be <1% utilized) ----
        x_scr[:, PAD:PAD + S] = x_ref[b:b + 1, :].astype(f32)
        acc = w0[:, 0:1] * x_scr[:, 0:S]
        for k in range(1, K):
            acc = acc + w0[:, k:k + 1] * x_scr[:, k:k + S]
        act_a[:, PAD:PAD + S] = jnp.maximum(acc + bias_ref[:, 0:1], 0.0)

        # ---- middle layers (W -> W): im2col + one deep MXU matmul each ----
        src, dst = act_a, act_b
        for l in range(n_mid):
            for k in range(K):
                col[k * W:(k + 1) * W, :] = src[:, k:k + S].astype(compute_dtype)
            mm = jnp.dot(wmid_ref[l], col[...],
                         preferred_element_type=jnp.float32)          # [W, S] f32
            dst[:, PAD:PAD + S] = jnp.maximum(mm + bias_ref[:, l + 1:l + 2], 0.0)
            src, dst = dst, src

        # ---- last layer (W -> 1): VPU FMA + sublane reduce (no ReLU) ----
        t = wl[:, 0:1] * src[:, 0:S]
        for k in range(1, K):
            t = t + wl[:, k:k + 1] * src[:, k:k + S]
        row = jnp.sum(t, axis=0, keepdims=True) + bias_ref[0:1, n_mid + 1:n_mid + 2]
        o_ref[b:b + 1, :] = row.astype(o_ref.dtype)


def _pick_batch_tile(B):
    """Batch elements per grid step; keeps blocks (8,128)-legal."""
    if B <= 8:
        return B            # block dim == full array dim -> always legal
    if B % 8 == 0:
        return 8            # one f32 sublane tile per step, grid >= 2 for megacore
    return B                # fall back to whole batch per step


def _fused_conv1dnet(Y, w_first, w_mid, w_last, bias_cols, *,
                     K, width, n_mid, compute_dtype):
    B, S = Y.shape
    PAD = K // 2
    spad = S + 2 * PAD
    n_layers = n_mid + 2
    kw_pad = w_mid.shape[-1]
    tb = _pick_batch_tile(B)

    # Crude VMEM budget check.  TODO(synk): add a sequence-tiling grid axis
    # with depth*PAD halos for very long S (v7x has only 64 MiB VMEM).
    itemsize = jnp.dtype(compute_dtype).itemsize
    vmem_est = (4 * spad                      # padded input row
                + 2 * 4 * width * spad        # ping/pong activations
                + itemsize * kw_pad * S       # im2col buffer
                + 2 * 2 * tb * S * 4          # double-buffered in/out blocks
                + 4 * width * (2 * K + n_layers) + itemsize * w_mid.size)
    assert vmem_est < 24 * 1024 * 1024, (
        "working set too large for a single grid step; add sequence tiling")

    kern = functools.partial(
        _fused_conv1dnet_kernel,
        kernel_size=K, seq_len=S, width=width, n_mid=n_mid,
        batch_tile=tb, compute_dtype=compute_dtype,
    )
    return pl.pallas_call(
        kern,
        out_shape=jax.ShapeDtypeStruct((B, S), Y.dtype),
        grid_spec=pltpu.PrefetchScalarGridSpec(
            num_scalar_prefetch=0,
            grid=(B // tb,),
            in_specs=[
                pl.BlockSpec((tb, S), lambda i: (i, 0)),
                pl.BlockSpec((width, K), lambda i: (0, 0)),
                pl.BlockSpec(w_mid.shape, lambda i: (0, 0, 0)),
                pl.BlockSpec((width, K), lambda i: (0, 0)),
                pl.BlockSpec((width, n_layers), lambda i: (0, 0)),
            ],
            out_specs=pl.BlockSpec((tb, S), lambda i: (i, 0)),
            scratch_shapes=[
                pltpu.VMEM((1, spad), jnp.float32),       # padded input row
                pltpu.VMEM((width, spad), jnp.float32),   # activations (ping)
                pltpu.VMEM((width, spad), jnp.float32),   # activations (pong)
                pltpu.VMEM((kw_pad, S), compute_dtype),   # im2col buffer
            ],
        ),
        compiler_params=pltpu.CompilerParams(dimension_semantics=("parallel",)),
    )(Y, w_first, w_mid, w_last, bias_cols)


# ---------------------------------------------------------------------------
# Parameters (PyTorch layout) + packing into the kernel's layouts.
# ---------------------------------------------------------------------------
def init_conv1dnet_params(key, input_channels=1, output_channels=1,
                          kernel_size=7, depth=3, width=32, bias=True,
                          dtype=jnp.float32):
    """Per-layer (w, b) with w in PyTorch layout [C_out, C_in, K], b [C_out]."""
    assert kernel_size % 2 == 1, "Kernel size should be odd for symmetric padding"
    assert depth >= 2
    io = [(input_channels, width)] + [(width, width)] * (depth - 2) \
        + [(width, output_channels)]
    params = []
    for (c_in, c_out) in io:
        key, k_w, k_b = jax.random.split(key, 3)
        scale = 1.0 / jnp.sqrt(c_in * kernel_size)
        w = jax.random.normal(k_w, (c_out, c_in, kernel_size), dtype) * scale
        b = (jax.random.normal(k_b, (c_out,), dtype) * scale) if bias \
            else jnp.zeros((c_out,), dtype)
        params.append((w, b))
    return params


def _pack_params(params, compute_dtype):
    """Re-layout weights/biases for the fused kernel (tiny, host-side)."""
    n_layers = len(params)
    w0, _ = params[0]
    wl, _ = params[-1]
    width, c_in0, K = w0.shape
    assert K % 2 == 1, "Kernel size must be odd"
    assert c_in0 == 1, "forward() implies input_channels == 1"
    assert wl.shape[0] == 1, "forward() implies output_channels == 1"
    n_mid = n_layers - 2

    w_first = w0[:, 0, :].astype(jnp.float32)        # [width, K]
    w_last = wl[0, :, :].astype(jnp.float32)         # [width, K]

    kw = K * width
    kw_pad = ((kw + 127) // 128) * 128               # 128-aligned contraction
    mids = []
    for (w, _) in params[1:-1]:
        assert w.shape == (width, width, K)
        w2d = jnp.transpose(w, (0, 2, 1)).reshape(width, kw)   # [C_out, K*C_in]
        mids.append(jnp.pad(w2d, ((0, 0), (0, kw_pad - kw))))
    if n_mid == 0:
        w_mid = jnp.zeros((1, width, kw_pad), compute_dtype)   # dummy, unused
    else:
        w_mid = jnp.stack(mids).astype(compute_dtype)

    cols = []
    for (w, b) in params:
        c_out = w.shape[0]
        cols.append(jnp.zeros((width,), jnp.float32).at[:c_out].set(
            b.astype(jnp.float32)))
    bias_cols = jnp.stack(cols, axis=1)              # [width, n_layers]

    meta = dict(K=K, width=width, n_mid=n_mid)
    return (w_first, w_mid, w_last, bias_cols), meta


def conv1dnet_forward(params, Y, binary=False, activation="relu",
                      compute_dtype=jnp.bfloat16):
    """Y: [B, S] -> [B, S]; matches Conv1DNet.forward."""
    if Y.ndim != 2:
        raise ValueError("Expected input of shape [B, S]")
    # TODO(synk): only 'relu' is wired into the fused kernel (module default).
    assert activation == "relu"
    (w_first, w_mid, w_last, bias_cols), meta = _pack_params(params, compute_dtype)
    out = _fused_conv1dnet(Y, w_first, w_mid, w_last, bias_cols,
                           compute_dtype=compute_dtype, **meta)
    if binary:
        # TODO(synk): thresholding is trivial glue; kept in plain JAX.
        out = (jax.nn.sigmoid(out) > 0.5).astype(jnp.int32)
    return out


# ---------------------------------------------------------------------------
# Pure-JAX reference (XLA conv) for correctness checks.
# ---------------------------------------------------------------------------
def _reference_forward(params, Y):
    x = Y[:, None, :]
    n = len(params)
    for i, (w, b) in enumerate(params):
        K = w.shape[-1]
        x = jax.lax.conv_general_dilated(
            x, w, window_strides=(1,), padding=[(K // 2, K // 2)],
            dimension_numbers=("NCH", "OIH", "NCH"),
            precision=jax.lax.Precision.HIGHEST,
        ) + b[None, :, None]
        if i < n - 1:
            x = jnp.maximum(x, 0.0)
    return x[:, 0, :]


if __name__ == "__main__":
    key = jax.random.PRNGKey(0)
    k_param, k_data = jax.random.split(key)

    B, S = 2, 128
    params = init_conv1dnet_params(
        k_param, input_channels=1, output_channels=1,
        kernel_size=7, depth=3, width=32, bias=True,
    )
    Y = jax.random.normal(k_data, (B, S), jnp.float32)

    ref = jax.block_until_ready(_reference_forward(params, Y))

    # f32 matmul path: tight tolerance (catches real regressions).
    out_f32 = jax.block_until_ready(
        conv1dnet_forward(params, Y, compute_dtype=jnp.float32))
    assert out_f32.shape == (B, S) and out_f32.dtype == jnp.float32
    err_f32 = float(jnp.max(jnp.abs(out_f32 - ref)))
    assert err_f32 < 1e-4, f"f32 path error too large: {err_f32}"

    # bf16 matmul path (default perf config): looser tolerance.
    out_bf16 = jax.block_until_ready(conv1dnet_forward(params, Y))
    assert out_bf16.shape == (B, S) and out_bf16.dtype == jnp.float32
    err_bf16 = float(jnp.max(jnp.abs(out_bf16 - ref)))
    assert err_bf16 < 5e-2, f"bf16 path error too large: {err_bf16}"

    # binary head.
    out_bin = jax.block_until_ready(conv1dnet_forward(params, Y, binary=True))
    assert out_bin.shape == (B, S) and out_bin.dtype == jnp.int32

    print("KERNEL_OK")
</pallas_src>

<mosaic_0001>
module attributes {stable_mosaic.version = 11 : i64} {
  func.func @_fused_conv1dnet_kernel(%arg0: i32, %arg1: memref<2x128xf32, #tpu.memory_space<vmem>>, %arg2: memref<32x7xf32, #tpu.memory_space<vmem>>, %arg3: memref<1x32x256xf32, #tpu.memory_space<vmem>>, %arg4: memref<32x7xf32, #tpu.memory_space<vmem>>, %arg5: memref<32x3xf32, #tpu.memory_space<vmem>>, %arg6: memref<2x128xf32, #tpu.memory_space<vmem>>, %arg7: memref<1x134xf32, #tpu.memory_space<vmem>>, %arg8: memref<32x134xf32, #tpu.memory_space<vmem>>, %arg9: memref<32x134xf32, #tpu.memory_space<vmem>>, %arg10: memref<256x128xf32, #tpu.memory_space<vmem>>) attributes {dimension_semantics = [#tpu.dimension_semantics<parallel>], iteration_bounds = array<i64: 1>, scalar_prefetch = 0 : i64, scratch_operands = 4 : i64, tpu.core_type = #tpu.core_type<tc>, window_params = [{transform_indices = @transform_0, window_bounds = array<i64: 2, 128>}, {pipeline_mode = #tpu.pipeline_mode<synchronous>, transform_indices = @transform_1, window_bounds = array<i64: 32, 7>}, {pipeline_mode = #tpu.pipeline_mode<synchronous>, transform_indices = @transform_2, window_bounds = array<i64: 1, 32, 256>}, {pipeline_mode = #tpu.pipeline_mode<synchronous>, transform_indices = @transform_3, window_bounds = array<i64: 32, 7>}, {pipeline_mode = #tpu.pipeline_mode<synchronous>, transform_indices = @transform_4, window_bounds = array<i64: 32, 3>}, {transform_indices = @transform_5, window_bounds = array<i64: 2, 128>}]} {
    %cst = arith.constant 0.000000e+00 : f32
    %0 = vector.broadcast %cst : f32 to vector<1x3xf32>
    %c0 = arith.constant 0 : index
    %c0_0 = arith.constant 0 : index
    %1 = vector.load %arg7[%c0, %c0_0] : memref<1x134xf32, #tpu.memory_space<vmem>>, vector<1x3xf32>
    tpu.vector_store %arg7[%c0, %c0_0], %0 {strides = array<i32>} : memref<1x134xf32, #tpu.memory_space<vmem>>, vector<1x3xf32>,
    %cst_1 = arith.constant 0.000000e+00 : f32
    %2 = vector.broadcast %cst_1 : f32 to vector<1x3xf32>
    %c0_2 = arith.constant 0 : index
    %c131 = arith.constant 131 : index
    %3 = vector.load %arg7[%c0_2, %c131] : memref<1x134xf32, #tpu.memory_space<vmem>>, vector<1x3xf32>
    tpu.vector_store %arg7[%c0_2, %c131], %2 {strides = array<i32>} : memref<1x134xf32, #tpu.memory_space<vmem>>, vector<1x3xf32>,
    %cst_3 = arith.constant 0.000000e+00 : f32
    %4 = vector.broadcast %cst_3 : f32 to vector<32x3xf32>
    %c0_4 = arith.constant 0 : index
    %c0_5 = arith.constant 0 : index
    %5 = vector.load %arg8[%c0_4, %c0_5] : memref<32x134xf32, #tpu.memory_space<vmem>>, vector<32x3xf32>
    tpu.vector_store %arg8[%c0_4, %c0_5], %4 {strides = array<i32>} : memref<32x134xf32, #tpu.memory_space<vmem>>, vector<32x3xf32>,
    %cst_6 = arith.constant 0.000000e+00 : f32
    %6 = vector.broadcast %cst_6 : f32 to vector<32x3xf32>
    %c0_7 = arith.constant 0 : index
    %c131_8 = arith.constant 131 : index
    %7 = vector.load %arg8[%c0_7, %c131_8] : memref<32x134xf32, #tpu.memory_space<vmem>>, vector<32x3xf32>
    tpu.vector_store %arg8[%c0_7, %c131_8], %6 {strides = array<i32>} : memref<32x134xf32, #tpu.memory_space<vmem>>, vector<32x3xf32>,
    %cst_9 = arith.constant 0.000000e+00 : f32
    %8 = vector.broadcast %cst_9 : f32 to vector<32x3xf32>
    %c0_10 = arith.constant 0 : index
    %c0_11 = arith.constant 0 : index
    %9 = vector.load %arg9[%c0_10, %c0_11] : memref<32x134xf32, #tpu.memory_space<vmem>>, vector<32x3xf32>
    tpu.vector_store %arg9[%c0_10, %c0_11], %8 {strides = array<i32>} : memref<32x134xf32, #tpu.memory_space<vmem>>, vector<32x3xf32>,
    %cst_12 = arith.constant 0.000000e+00 : f32
    %10 = vector.broadcast %cst_12 : f32 to vector<32x3xf32>
    %c0_13 = arith.constant 0 : index
    %c131_14 = arith.constant 131 : index
    %11 = vector.load %arg9[%c0_13, %c131_14] : memref<32x134xf32, #tpu.memory_space<vmem>>, vector<32x3xf32>
    tpu.vector_store %arg9[%c0_13, %c131_14], %10 {strides = array<i32>} : memref<32x134xf32, #tpu.memory_space<vmem>>, vector<32x3xf32>,
    %cst_15 = arith.constant 0.000000e+00 : f32
    %12 = vector.broadcast %cst_15 : f32 to vector<32x128xf32>
    %c224 = arith.constant 224 : index
    %c0_16 = arith.constant 0 : index
    %13 = vector.load %arg10[%c224, %c0_16] : memref<256x128xf32, #tpu.memory_space<vmem>>, vector<32x128xf32>
    tpu.vector_store %arg10[%c224, %c0_16], %12 {strides = array<i32>} : memref<256x128xf32, #tpu.memory_space<vmem>>, vector<32x128xf32>,
    %c0_17 = arith.constant 0 : index
    %c0_18 = arith.constant 0 : index
    %14 = vector.load %arg2[%c0_17, %c0_18] : memref<32x7xf32, #tpu.memory_space<vmem>>, vector<32x7xf32>
    %c0_19 = arith.constant 0 : index
    %c0_20 = arith.constant 0 : index
    %15 = vector.load %arg4[%c0_19, %c0_20] : memref<32x7xf32, #tpu.memory_space<vmem>>, vector<32x7xf32>
    %c0_21 = arith.constant 0 : index
    %c0_22 = arith.constant 0 : index
    %16 = vector.load %arg1[%c0_21, %c0_22] : memref<2x128xf32, #tpu.memory_space<vmem>>, vector<1x128xf32>
    %c0_23 = arith.constant 0 : index
    %c3 = arith.constant 3 : index
    %17 = vector.load %arg7[%c0_23, %c3] : memref<1x134xf32, #tpu.memory_space<vmem>>, vector<1x128xf32>
    tpu.vector_store %arg7[%c0_23, %c3], %16 {strides = array<i32>} : memref<1x134xf32, #tpu.memory_space<vmem>>, vector<1x128xf32>,
    %18 = vector.extract_strided_slice %14 {offsets = [0, 0], sizes = [32, 1], strides = [1, 1]} : vector<32x7xf32> to vector<32x1xf32>
    %c0_24 = arith.constant 0 : index
    %c0_25 = arith.constant 0 : index
    %19 = vector.load %arg7[%c0_24, %c0_25] : memref<1x134xf32, #tpu.memory_space<vmem>>, vector<1x128xf32>
    %20 = vector.broadcast %18 : vector<32x1xf32> to vector<32x128xf32>
    %21 = vector.broadcast %19 : vector<1x128xf32> to vector<32x128xf32>
    %22 = arith.mulf %20, %21 : vector<32x128xf32>
    %23 = vector.extract_strided_slice %14 {offsets = [0, 1], sizes = [32, 1], strides = [1, 1]} : vector<32x7xf32> to vector<32x1xf32>
    %c0_26 = arith.constant 0 : index
    %c1 = arith.constant 1 : index
    %24 = vector.load %arg7[%c0_26, %c1] : memref<1x134xf32, #tpu.memory_space<vmem>>, vector<1x128xf32>
    %25 = vector.broadcast %23 : vector<32x1xf32> to vector<32x128xf32>
    %26 = vector.broadcast %24 : vector<1x128xf32> to vector<32x128xf32>
    %27 = arith.mulf %25, %26 : vector<32x128xf32>
    %28 = arith.addf %22, %27 : vector<32x128xf32>
    %29 = vector.extract_strided_slice %14 {offsets = [0, 2], sizes = [32, 1], strides = [1, 1]} : vector<32x7xf32> to vector<32x1xf32>
    %c0_27 = arith.constant 0 : index
    %c2 = arith.constant 2 : index
    %30 = vector.load %arg7[%c0_27, %c2] : memref<1x134xf32, #tpu.memory_space<vmem>>, vector<1x128xf32>
    %31 = vector.broadcast %29 : vector<32x1xf32> to vector<32x128xf32>
    %32 = vector.broadcast %30 : vector<1x128xf32> to vector<32x128xf32>
    %33 = arith.mulf %31, %32 : vector<32x128xf32>
    %34 = arith.addf %28, %33 : vector<32x128xf32>
    %35 = vector.extract_strided_slice %14 {offsets = [0, 3], sizes = [32, 1], strides = [1, 1]} : vector<32x7xf32> to vector<32x1xf32>
    %c0_28 = arith.constant 0 : index
    %c3_29 = arith.constant 3 : index
    %36 = vector.load %arg7[%c0_28, %c3_29] : memref<1x134xf32, #tpu.memory_space<vmem>>, vector<1x128xf32>
    %37 = vector.broadcast %35 : vector<32x1xf32> to vector<32x128xf32>
    %38 = vector.broadcast %36 : vector<1x128xf32> to vector<32x128xf32>
    %39 = arith.mulf %37, %38 : vector<32x128xf32>
    %40 = arith.addf %34, %39 : vector<32x128xf32>
    %41 = vector.extract_strided_slice %14 {offsets = [0, 4], sizes = [32, 1], strides = [1, 1]} : vector<32x7xf32> to vector<32x1xf32>
    %c0_30 = arith.constant 0 : index
    %c4 = arith.constant 4 : index
    %42 = vector.load %arg7[%c0_30, %c4] : memref<1x134xf32, #tpu.memory_space<vmem>>, vector<1x128xf32>
    %43 = vector.broadcast %41 : vector<32x1xf32> to vector<32x128xf32>
    %44 = vector.broadcast %42 : vector<1x128xf32> to vector<32x128xf32>
    %45 = arith.mulf %43, %44 : vector<32x128xf32>
    %46 = arith.addf %40, %45 : vector<32x128xf32>
    %47 = vector.extract_strided_slice %14 {offsets = [0, 5], sizes = [32, 1], strides = [1, 1]} : vector<32x7xf32> to vector<32x1xf32>
    %c0_31 = arith.constant 0 : index
    %c5 = arith.constant 5 : index
    %48 = vector.load %arg7[%c0_31, %c5] : memref<1x134xf32, #tpu.memory_space<vmem>>, vector<1x128xf32>
    %49 = vector.broadcast %47 : vector<32x1xf32> to vector<32x128xf32>
    %50 = vector.broadcast %48 : vector<1x128xf32> to vector<32x128xf32>
    %51 = arith.mulf %49, %50 : vector<32x128xf32>
    %52 = arith.addf %46, %51 : vector<32x128xf32>
    %53 = vector.extract_strided_slice %14 {offsets = [0, 6], sizes = [32, 1], strides = [1, 1]} : vector<32x7xf32> to vector<32x1xf32>
    %c0_32 = arith.constant 0 : index
    %c6 = arith.constant 6 : index
    %54 = vector.load %arg7[%c0_32, %c6] : memref<1x134xf32, #tpu.memory_space<vmem>>, vector<1x128xf32>
    %55 = vector.broadcast %53 : vector<32x1xf32> to vector<32x128xf32>
    %56 = vector.broadcast %54 : vector<1x128xf32> to vector<32x128xf32>
    %57 = arith.mulf %55, %56 : vector<32x128xf32>
    %58 = arith.addf %52, %57 : vector<32x128xf32>
    %c0_33 = arith.constant 0 : index
    %c0_34 = arith.constant 0 : index
    %59 = vector.load %arg5[%c0_33, %c0_34] : memref<32x3xf32, #tpu.memory_space<vmem>>, vector<32x1xf32>
    %60 = vector.broadcast %59 : vector<32x1xf32> to vector<32x128xf32>
    %61 = arith.addf %58, %60 : vector<32x128xf32>
    %cst_35 = arith.constant 0.000000e+00 : f32
    %62 = vector.broadcast %cst_35 : f32 to vector<32x128xf32>
    %63 = arith.maximumf %61, %62 : vector<32x128xf32>
    %c0_36 = arith.constant 0 : index
    %c3_37 = arith.constant 3 : index
    %64 = vector.load %arg8[%c0_36, %c3_37] : memref<32x134xf32, #tpu.memory_space<vmem>>, vector<32x128xf32>
    tpu.vector_store %arg8[%c0_36, %c3_37], %63 {strides = array<i32>} : memref<32x134xf32, #tpu.memory_space<vmem>>, vector<32x128xf32>,
    %c0_38 = arith.constant 0 : index
    %c0_39 = arith.constant 0 : index
    %65 = vector.load %arg8[%c0_38, %c0_39] : memref<32x134xf32, #tpu.memory_space<vmem>>, vector<32x128xf32>
    %c0_40 = arith.constant 0 : index
    %c0_41 = arith.constant 0 : index
    %66 = vector.load %arg10[%c0_40, %c0_41] : memref<256x128xf32, #tpu.memory_space<vmem>>, vector<32x128xf32>
    tpu.vector_store %arg10[%c0_40, %c0_41], %65 {strides = array<i32>} : memref<256x128xf32, #tpu.memory_space<vmem>>, vector<32x128xf32>,
    %c0_42 = arith.constant 0 : index
    %c1_43 = arith.constant 1 : index
    %67 = vector.load %arg8[%c0_42, %c1_43] : memref<32x134xf32, #tpu.memory_space<vmem>>, vector<32x128xf32>
    %c32 = arith.constant 32 : index
    %c0_44 = arith.constant 0 : index
    %68 = vector.load %arg10[%c32, %c0_44] : memref<256x128xf32, #tpu.memory_space<vmem>>, vector<32x128xf32>
    tpu.vector_store %arg10[%c32, %c0_44], %67 {strides = array<i32>} : memref<256x128xf32, #tpu.memory_space<vmem>>, vector<32x128xf32>,
    %c0_45 = arith.constant 0 : index
    %c2_46 = arith.constant 2 : index
    %69 = vector.load %arg8[%c0_45, %c2_46] : memref<32x134xf32, #tpu.memory_space<vmem>>, vector<32x128xf32>
    %c64 = arith.constant 64 : index
    %c0_47 = arith.constant 0 : index
    %70 = vector.load %arg10[%c64, %c0_47] : memref<256x128xf32, #tpu.memory_space<vmem>>, vector<32x128xf32>
    tpu.vector_store %arg10[%c64, %c0_47], %69 {strides = array<i32>} : memref<256x128xf32, #tpu.memory_space<vmem>>, vector<32x128xf32>,
    %c0_48 = arith.constant 0 : index
    %c3_49 = arith.constant 3 : index
    %71 = vector.load %arg8[%c0_48, %c3_49] : memref<32x134xf32, #tpu.memory_space<vmem>>, vector<32x128xf32>
    %c96 = arith.constant 96 : index
    %c0_50 = arith.constant 0 : index
    %72 = vector.load %arg10[%c96, %c0_50] : memref<256x128xf32, #tpu.memory_space<vmem>>, vector<32x128xf32>
    tpu.vector_store %arg10[%c96, %c0_50], %71 {strides = array<i32>} : memref<256x128xf32, #tpu.memory_space<vmem>>, vector<32x128xf32>,
    %c0_51 = arith.constant 0 : index
    %c4_52 = arith.constant 4 : index
    %73 = vector.load %arg8[%c0_51, %c4_52] : memref<32x134xf32, #tpu.memory_space<vmem>>, vector<32x128xf32>
    %c128 = arith.constant 128 : index
    %c0_53 = arith.constant 0 : index
    %74 = vector.load %arg10[%c128, %c0_53] : memref<256x128xf32, #tpu.memory_space<vmem>>, vector<32x128xf32>
    tpu.vector_store %arg10[%c128, %c0_53], %73 {strides = array<i32>} : memref<256x128xf32, #tpu.memory_space<vmem>>, vector<32x128xf32>,
    %c0_54 = arith.constant 0 : index
    %c5_55 = arith.constant 5 : index
    %75 = vector.load %arg8[%c0_54, %c5_55] : memref<32x134xf32, #tpu.memory_space<vmem>>, vector<32x128xf32>
    %c160 = arith.constant 160 : index
    %c0_56 = arith.constant 0 : index
    %76 = vector.load %arg10[%c160, %c0_56] : memref<256x128xf32, #tpu.memory_space<vmem>>, vector<32x128xf32>
    tpu.vector_store %arg10[%c160, %c0_56], %75 {strides = array<i32>} : memref<256x128xf32, #tpu.memory_space<vmem>>, vector<32x128xf32>,
    %c0_57 = arith.constant 0 : index
    %c6_58 = arith.constant 6 : index
    %77 = vector.load %arg8[%c0_57, %c6_58] : memref<32x134xf32, #tpu.memory_space<vmem>>, vector<32x128xf32>
    %c192 = arith.constant 192 : index
    %c0_59 = arith.constant 0 : index
    %78 = vector.load %arg10[%c192, %c0_59] : memref<256x128xf32, #tpu.memory_space<vmem>>, vector<32x128xf32>
    tpu.vector_store %arg10[%c192, %c0_59], %77 {strides = array<i32>} : memref<256x128xf32, #tpu.memory_space<vmem>>, vector<32x128xf32>,
    %c0_60 = arith.constant 0 : index
    %c0_61 = arith.constant 0 : index
    %c0_62 = arith.constant 0 : index
    %79 = vector.load %arg3[%c0_60, %c0_61, %c0_62] : memref<1x32x256xf32, #tpu.memory_space<vmem>>, vector<1x32x256xf32>
    %80 = vector.shape_cast %79 : vector<1x32x256xf32> to vector<32x256xf32>
    %c0_63 = arith.constant 0 : index
    %c0_64 = arith.constant 0 : index
    %81 = vector.load %arg10[%c0_63, %c0_64] : memref<256x128xf32, #tpu.memory_space<vmem>>, vector<256x128xf32>
    %cst_65 = arith.constant dense<0.000000e+00> : vector<32x128xf32>
    %82 = tpu.matmul %80, %81, %cst_65 {dimension_numbers = #tpu.dot_dimension_numbers<[1], [0], [0], [1], [0, 0, 1, 1], [], []>} : vector<32x256xf32>, vector<256x128xf32>, vector<32x128xf32> -> vector<32x128xf32>
    %c0_66 = arith.constant 0 : index
    %c1_67 = arith.constant 1 : index
    %83 = vector.load %arg5[%c0_66, %c1_67] : memref<32x3xf32, #tpu.memory_space<vmem>>, vector<32x1xf32>
    %84 = vector.broadcast %83 : vector<32x1xf32> to vector<32x128xf32>
    %85 = arith.addf %82, %84 : vector<32x128xf32>
    %cst_68 = arith.constant 0.000000e+00 : f32
    %86 = vector.broadcast %cst_68 : f32 to vector<32x128xf32>
    %87 = arith.maximumf %85, %86 : vector<32x128xf32>
    %c0_69 = arith.constant 0 : index
    %c3_70 = arith.constant 3 : index
    %88 = vector.load %arg9[%c0_69, %c3_70] : memref<32x134xf32, #tpu.memory_space<vmem>>, vector<32x128xf32>
    tpu.vector_store %arg9[%c0_69, %c3_70], %87 {strides = array<i32>} : memref<32x134xf32, #tpu.memory_space<vmem>>, vector<32x128xf32>,
    %89 = vector.extract_strided_slice %15 {offsets = [0, 0], sizes = [32, 1], strides = [1, 1]} : vector<32x7xf32> to vector<32x1xf32>
    %c0_71 = arith.constant 0 : index
    %c0_72 = arith.constant 0 : index
    %90 = vector.load %arg9[%c0_71, %c0_72] : memref<32x134xf32, #tpu.memory_space<vmem>>, vector<32x128xf32>
    %91 = vector.broadcast %89 : vector<32x1xf32> to vector<32x128xf32>
    %92 = arith.mulf %91, %90 : vector<32x128xf32>
    %93 = vector.extract_strided_slice %15 {offsets = [0, 1], sizes = [32, 1], strides = [1, 1]} : vector<32x7xf32> to vector<32x1xf32>
    %c0_73 = arith.constant 0 : index
    %c1_74 = arith.constant 1 : index
    %94 = vector.load %arg9[%c0_73, %c1_74] : memref<32x134xf32, #tpu.memory_space<vmem>>, vector<32x128xf32>
    %95 = vector.broadcast %93 : vector<32x1xf32> to vector<32x128xf32>
    %96 = arith.mulf %95, %94 : vector<32x128xf32>
    %97 = arith.addf %92, %96 : vector<32x128xf32>
    %98 = vector.extract_strided_slice %15 {offsets = [0, 2], sizes = [32, 1], strides = [1, 1]} : vector<32x7xf32> to vector<32x1xf32>
    %c0_75 = arith.constant 0 : index
    %c2_76 = arith.constant 2 : index
    %99 = vector.load %arg9[%c0_75, %c2_76] : memref<32x134xf32, #tpu.memory_space<vmem>>, vector<32x128xf32>
    %100 = vector.broadcast %98 : vector<32x1xf32> to vector<32x128xf32>
    %101 = arith.mulf %100, %99 : vector<32x128xf32>
    %102 = arith.addf %97, %101 : vector<32x128xf32>
    %103 = vector.extract_strided_slice %15 {offsets = [0, 3], sizes = [32, 1], strides = [1, 1]} : vector<32x7xf32> to vector<32x1xf32>
    %c0_77 = arith.constant 0 : index
    %c3_78 = arith.constant 3 : index
    %104 = vector.load %arg9[%c0_77, %c3_78] : memref<32x134xf32, #tpu.memory_space<vmem>>, vector<32x128xf32>
    %105 = vector.broadcast %103 : vector<32x1xf32> to vector<32x128xf32>
    %106 = arith.mulf %105, %104 : vector<32x128xf32>
    %107 = arith.addf %102, %106 : vector<32x128xf32>
    %108 = vector.extract_strided_slice %15 {offsets = [0, 4], sizes = [32, 1], strides = [1, 1]} : vector<32x7xf32> to vector<32x1xf32>
    %c0_79 = arith.constant 0 : index
    %c4_80 = arith.constant 4 : index
    %109 = vector.load %arg9[%c0_79, %c4_80] : memref<32x134xf32, #tpu.memory_space<vmem>>, vector<32x128xf32>
    %110 = vector.broadcast %108 : vector<32x1xf32> to vector<32x128xf32>
    %111 = arith.mulf %110, %109 : vector<32x128xf32>
    %112 = arith.addf %107, %111 : vector<32x128xf32>
    %113 = vector.extract_strided_slice %15 {offsets = [0, 5], sizes = [32, 1], strides = [1, 1]} : vector<32x7xf32> to vector<32x1xf32>
    %c0_81 = arith.constant 0 : index
    %c5_82 = arith.constant 5 : index
    %114 = vector.load %arg9[%c0_81, %c5_82] : memref<32x134xf32, #tpu.memory_space<vmem>>, vector<32x128xf32>
    %115 = vector.broadcast %113 : vector<32x1xf32> to vector<32x128xf32>
    %116 = arith.mulf %115, %114 : vector<32x128xf32>
    %117 = arith.addf %112, %116 : vector<32x128xf32>
    %118 = vector.extract_strided_slice %15 {offsets = [0, 6], sizes = [32, 1], strides = [1, 1]} : vector<32x7xf32> to vector<32x1xf32>
    %c0_83 = arith.constant 0 : index
    %c6_84 = arith.constant 6 : index
    %119 = vector.load %arg9[%c0_83, %c6_84] : memref<32x134xf32, #tpu.memory_space<vmem>>, vector<32x128xf32>
    %120 = vector.broadcast %118 : vector<32x1xf32> to vector<32x128xf32>
    %121 = arith.mulf %120, %119 : vector<32x128xf32>
    %122 = arith.addf %117, %121 : vector<32x128xf32>
    %cst_85 = arith.constant dense<0.000000e+00> : vector<128xf32>
    %123 = vector.multi_reduction <add>, %122, %cst_85 [0] : vector<32x128xf32> to vector<128xf32>
    %124 = vector.shape_cast %123 : vector<128xf32> to vector<1x128xf32>
    %c0_86 = arith.constant 0 : index
    %c2_87 = arith.constant 2 : index
    %125 = vector.load %arg5[%c0_86, %c2_87] : memref<32x3xf32, #tpu.memory_space<vmem>>, vector<1x1xf32>
    %126 = vector.broadcast %125 : vector<1x1xf32> to vector<1x128xf32>
    %127 = arith.addf %124, %126 : vector<1x128xf32>
    %c0_88 = arith.constant 0 : index
    %c0_89 = arith.constant 0 : index
    %128 = vector.load %arg6[%c0_88, %c0_89] : memref<2x128xf32, #tpu.memory_space<vmem>>, vector<1x128xf32>
    tpu.vector_store %arg6[%c0_88, %c0_89], %127 {strides = array<i32>} : memref<2x128xf32, #tpu.memory_space<vmem>>, vector<1x128xf32>,
    %c1_90 = arith.constant 1 : index
    %c0_91 = arith.constant 0 : index
    %129 = vector.load %arg1[%c1_90, %c0_91] : memref<2x128xf32, #tpu.memory_space<vmem>>, vector<1x128xf32>
    %c0_92 = arith.constant 0 : index
    %c3_93 = arith.constant 3 : index
    %130 = vector.load %arg7[%c0_92, %c3_93] : memref<1x134xf32, #tpu.memory_space<vmem>>, vector<1x128xf32>
    tpu.vector_store %arg7[%c0_92, %c3_93], %129 {strides = array<i32>} : memref<1x134xf32, #tpu.memory_space<vmem>>, vector<1x128xf32>,
    %131 = vector.extract_strided_slice %14 {offsets = [0, 0], sizes = [32, 1], strides = [1, 1]} : vector<32x7xf32> to vector<32x1xf32>
    %c0_94 = arith.constant 0 : index
    %c0_95 = arith.constant 0 : index
    %132 = vector.load %arg7[%c0_94, %c0_95] : memref<1x134xf32, #tpu.memory_space<vmem>>, vector<1x128xf32>
    %133 = vector.broadcast %131 : vector<32x1xf32> to vector<32x128xf32>
    %134 = vector.broadcast %132 : vector<1x128xf32> to vector<32x128xf32>
    %135 = arith.mulf %133, %134 : vector<32x128xf32>
    %136 = vector.extract_strided_slice %14 {offsets = [0, 1], sizes = [32, 1], strides = [1, 1]} : vector<32x7xf32> to vector<32x1xf32>
    %c0_96 = arith.constant 0 : index
    %c1_97 = arith.constant 1 : index
    %137 = vector.load %arg7[%c0_96, %c1_97] : memref<1x134xf32, #tpu.memory_space<vmem>>, vector<1x128xf32>
    %138 = vector.broadcast %136 : vector<32x1xf32> to vector<32x128xf32>
    %139 = vector.broadcast %137 : vector<1x128xf32> to vector<32x128xf32>
    %140 = arith.mulf %138, %139 : vector<32x128xf32>
    %141 = arith.addf %135, %140 : vector<32x128xf32>
    %142 = vector.extract_strided_slice %14 {offsets = [0, 2], sizes = [32, 1], strides = [1, 1]} : vector<32x7xf32> to vector<32x1xf32>
    %c0_98 = arith.constant 0 : index
    %c2_99 = arith.constant 2 : index
    %143 = vector.load %arg7[%c0_98, %c2_99] : memref<1x134xf32, #tpu.memory_space<vmem>>, vector<1x128xf32>
    %144 = vector.broadcast %142 : vector<32x1xf32> to vector<32x128xf32>
    %145 = vector.broadcast %143 : vector<1x128xf32> to vector<32x128xf32>
    %146 = arith.mulf %144, %145 : vector<32x128xf32>
    %147 = arith.addf %141, %146 : vector<32x128xf32>
    %148 = vector.extract_strided_slice %14 {offsets = [0, 3], sizes = [32, 1], strides = [1, 1]} : vector<32x7xf32> to vector<32x1xf32>
    %c0_100 = arith.constant 0 : index
    %c3_101 = arith.constant 3 : index
    %149 = vector.load %arg7[%c0_100, %c3_101] : memref<1x134xf32, #tpu.memory_space<vmem>>, vector<1x128xf32>
    %150 = vector.broadcast %148 : vector<32x1xf32> to vector<32x128xf32>
    %151 = vector.broadcast %149 : vector<1x128xf32> to vector<32x128xf32>
    %152 = arith.mulf %150, %151 : vector<32x128xf32>
    %153 = arith.addf %147, %152 : vector<32x128xf32>
    %154 = vector.extract_strided_slice %14 {offsets = [0, 4], sizes = [32, 1], strides = [1, 1]} : vector<32x7xf32> to vector<32x1xf32>
    %c0_102 = arith.constant 0 : index
    %c4_103 = arith.constant 4 : index
    %155 = vector.load %arg7[%c0_102, %c4_103] : memref<1x134xf32, #tpu.memory_space<vmem>>, vector<1x128xf32>
    %156 = vector.broadcast %154 : vector<32x1xf32> to vector<32x128xf32>
    %157 = vector.broadcast %155 : vector<1x128xf32> to vector<32x128xf32>
    %158 = arith.mulf %156, %157 : vector<32x128xf32>
    %159 = arith.addf %153, %158 : vector<32x128xf32>
    %160 = vector.extract_strided_slice %14 {offsets = [0, 5], sizes = [32, 1], strides = [1, 1]} : vector<32x7xf32> to vector<32x1xf32>
    %c0_104 = arith.constant 0 : index
    %c5_105 = arith.constant 5 : index
    %161 = vector.load %arg7[%c0_104, %c5_105] : memref<1x134xf32, #tpu.memory_space<vmem>>, vector<1x128xf32>
    %162 = vector.broadcast %160 : vector<32x1xf32> to vector<32x128xf32>
    %163 = vector.broadcast %161 : vector<1x128xf32> to vector<32x128xf32>
    %164 = arith.mulf %162, %163 : vector<32x128xf32>
    %165 = arith.addf %159, %164 : vector<32x128xf32>
    %166 = vector.extract_strided_slice %14 {offsets = [0, 6], sizes = [32, 1], strides = [1, 1]} : vector<32x7xf32> to vector<32x1xf32>
    %c0_106 = arith.constant 0 : index
    %c6_107 = arith.constant 6 : index
    %167 = vector.load %arg7[%c0_106, %c6_107] : memref<1x134xf32, #tpu.memory_space<vmem>>, vector<1x128xf32>
    %168 = vector.broadcast %166 : vector<32x1xf32> to vector<32x128xf32>
    %169 = vector.broadcast %167 : vector<1x128xf32> to vector<32x128xf32>
    %170 = arith.mulf %168, %169 : vector<32x128xf32>
    %171 = arith.addf %165, %170 : vector<32x128xf32>
    %c0_108 = arith.constant 0 : index
    %c0_109 = arith.constant 0 : index
    %172 = vector.load %arg5[%c0_108, %c0_109] : memref<32x3xf32, #tpu.memory_space<vmem>>, vector<32x1xf32>
    %173 = vector.broadcast %172 : vector<32x1xf32> to vector<32x128xf32>
    %174 = arith.addf %171, %173 : vector<32x128xf32>
    %cst_110 = arith.constant 0.000000e+00 : f32
    %175 = vector.broadcast %cst_110 : f32 to vector<32x128xf32>
    %176 = arith.maximumf %174, %175 : vector<32x128xf32>
    %c0_111 = arith.constant 0 : index
    %c3_112 = arith.constant 3 : index
    %177 = vector.load %arg8[%c0_111, %c3_112] : memref<32x134xf32, #tpu.memory_space<vmem>>, vector<32x128xf32>
    tpu.vector_store %arg8[%c0_111, %c3_112], %176 {strides = array<i32>} : memref<32x134xf32, #tpu.memory_space<vmem>>, vector<32x128xf32>,
    %c0_113 = arith.constant 0 : index
    %c0_114 = arith.constant 0 : index
    %178 = vector.load %arg8[%c0_113, %c0_114] : memref<32x134xf32, #tpu.memory_space<vmem>>, vector<32x128xf32>
    %c0_115 = arith.constant 0 : index
    %c0_116 = arith.constant 0 : index
    %179 = vector.load %arg10[%c0_115, %c0_116] : memref<256x128xf32, #tpu.memory_space<vmem>>, vector<32x128xf32>
    tpu.vector_store %arg10[%c0_115, %c0_116], %178 {strides = array<i32>} : memref<256x128xf32, #tpu.memory_space<vmem>>, vector<32x128xf32>,
    %c0_117 = arith.constant 0 : index
    %c1_118 = arith.constant 1 : index
    %180 = vector.load %arg8[%c0_117, %c1_118] : memref<32x134xf32, #tpu.memory_space<vmem>>, vector<32x128xf32>
    %c32_119 = arith.constant 32 : index
    %c0_120 = arith.constant 0 : index
    %181 = vector.load %arg10[%c32_119, %c0_120] : memref<256x128xf32, #tpu.memory_space<vmem>>, vector<32x128xf32>
    tpu.vector_store %arg10[%c32_119, %c0_120], %180 {strides = array<i32>} : memref<256x128xf32, #tpu.memory_space<vmem>>, vector<32x128xf32>,
    %c0_121 = arith.constant 0 : index
    %c2_122 = arith.constant 2 : index
    %182 = vector.load %arg8[%c0_121, %c2_122] : memref<32x134xf32, #tpu.memory_space<vmem>>, vector<32x128xf32>
    %c64_123 = arith.constant 64 : index
    %c0_124 = arith.constant 0 : index
    %183 = vector.load %arg10[%c64_123, %c0_124] : memref<256x128xf32, #tpu.memory_space<vmem>>, vector<32x128xf32>
    tpu.vector_store %arg10[%c64_123, %c0_124], %182 {strides = array<i32>} : memref<256x128xf32, #tpu.memory_space<vmem>>, vector<32x128xf32>,
    %c0_125 = arith.constant 0 : index
    %c3_126 = arith.constant 3 : index
    %184 = vector.load %arg8[%c0_125, %c3_126] : memref<32x134xf32, #tpu.memory_space<vmem>>, vector<32x128xf32>
    %c96_127 = arith.constant 96 : index
    %c0_128 = arith.constant 0 : index
    %185 = vector.load %arg10[%c96_127, %c0_128] : memref<256x128xf32, #tpu.memory_space<vmem>>, vector<32x128xf32>
    tpu.vector_store %arg10[%c96_127, %c0_128], %184 {strides = array<i32>} : memref<256x128xf32, #tpu.memory_space<vmem>>, vector<32x128xf32>,
    %c0_129 = arith.constant 0 : index
    %c4_130 = arith.constant 4 : index
    %186 = vector.load %arg8[%c0_129, %c4_130] : memref<32x134xf32, #tpu.memory_space<vmem>>, vector<32x128xf32>
    %c128_131 = arith.constant 128 : index
    %c0_132 = arith.constant 0 : index
    %187 = vector.load %arg10[%c128_131, %c0_132] : memref<256x128xf32, #tpu.memory_space<vmem>>, vector<32x128xf32>
    tpu.vector_store %arg10[%c128_131, %c0_132], %186 {strides = array<i32>} : memref<256x128xf32, #tpu.memory_space<vmem>>, vector<32x128xf32>,
    %c0_133 = arith.constant 0 : index
    %c5_134 = arith.constant 5 : index
    %188 = vector.load %arg8[%c0_133, %c5_134] : memref<32x134xf32, #tpu.memory_space<vmem>>, vector<32x128xf32>
    %c160_135 = arith.constant 160 : index
    %c0_136 = arith.constant 0 : index
    %189 = vector.load %arg10[%c160_135, %c0_136] : memref<256x128xf32, #tpu.memory_space<vmem>>, vector<32x128xf32>
    tpu.vector_store %arg10[%c160_135, %c0_136], %188 {strides = array<i32>} : memref<256x128xf32, #tpu.memory_space<vmem>>, vector<32x128xf32>,
    %c0_137 = arith.constant 0 : index
    %c6_138 = arith.constant 6 : index
    %190 = vector.load %arg8[%c0_137, %c6_138] : memref<32x134xf32, #tpu.memory_space<vmem>>, vector<32x128xf32>
    %c192_139 = arith.constant 192 : index
    %c0_140 = arith.constant 0 : index
    %191 = vector.load %arg10[%c192_139, %c0_140] : memref<256x128xf32, #tpu.memory_space<vmem>>, vector<32x128xf32>
    tpu.vector_store %arg10[%c192_139, %c0_140], %190 {strides = array<i32>} : memref<256x128xf32, #tpu.memory_space<vmem>>, vector<32x128xf32>,
    %c0_141 = arith.constant 0 : index
    %c0_142 = arith.constant 0 : index
    %c0_143 = arith.constant 0 : index
    %192 = vector.load %arg3[%c0_141, %c0_142, %c0_143] : memref<1x32x256xf32, #tpu.memory_space<vmem>>, vector<1x32x256xf32>
    %193 = vector.shape_cast %192 : vector<1x32x256xf32> to vector<32x256xf32>
    %c0_144 = arith.constant 0 : index
    %c0_145 = arith.constant 0 : index
    %194 = vector.load %arg10[%c0_144, %c0_145] : memref<256x128xf32, #tpu.memory_space<vmem>>, vector<256x128xf32>
    %cst_146 = arith.constant dense<0.000000e+00> : vector<32x128xf32>
    %195 = tpu.matmul %193, %194, %cst_146 {dimension_numbers = #tpu.dot_dimension_numbers<[1], [0], [0], [1], [0, 0, 1, 1], [], []>} : vector<32x256xf32>, vector<256x128xf32>, vector<32x128xf32> -> vector<32x128xf32>
    %c0_147 = arith.constant 0 : index
    %c1_148 = arith.constant 1 : index
    %196 = vector.load %arg5[%c0_147, %c1_148] : memref<32x3xf32, #tpu.memory_space<vmem>>, vector<32x1xf32>
    %197 = vector.broadcast %196 : vector<32x1xf32> to vector<32x128xf32>
    %198 = arith.addf %195, %197 : vector<32x128xf32>
    %cst_149 = arith.constant 0.000000e+00 : f32
    %199 = vector.broadcast %cst_149 : f32 to vector<32x128xf32>
    %200 = arith.maximumf %198, %199 : vector<32x128xf32>
    %c0_150 = arith.constant 0 : index
    %c3_151 = arith.constant 3 : index
    %201 = vector.load %arg9[%c0_150, %c3_151] : memref<32x134xf32, #tpu.memory_space<vmem>>, vector<32x128xf32>
    tpu.vector_store %arg9[%c0_150, %c3_151], %200 {strides = array<i32>} : memref<32x134xf32, #tpu.memory_space<vmem>>, vector<32x128xf32>,
    %202 = vector.extract_strided_slice %15 {offsets = [0, 0], sizes = [32, 1], strides = [1, 1]} : vector<32x7xf32> to vector<32x1xf32>
    %c0_152 = arith.constant 0 : index
    %c0_153 = arith.constant 0 : index
    %203 = vector.load %arg9[%c0_152, %c0_153] : memref<32x134xf32, #tpu.memory_space<vmem>>, vector<32x128xf32>
    %204 = vector.broadcast %202 : vector<32x1xf32> to vector<32x128xf32>
    %205 = arith.mulf %204, %203 : vector<32x128xf32>
    %206 = vector.extract_strided_slice %15 {offsets = [0, 1], sizes = [32, 1], strides = [1, 1]} : vector<32x7xf32> to vector<32x1xf32>
    %c0_154 = arith.constant 0 : index
    %c1_155 = arith.constant 1 : index
    %207 = vector.load %arg9[%c0_154, %c1_155] : memref<32x134xf32, #tpu.memory_space<vmem>>, vector<32x128xf32>
    %208 = vector.broadcast %206 : vector<32x1xf32> to vector<32x128xf32>
    %209 = arith.mulf %208, %207 : vector<32x128xf32>
    %210 = arith.addf %205, %209 : vector<32x128xf32>
    %211 = vector.extract_strided_slice %15 {offsets = [0, 2], sizes = [32, 1], strides = [1, 1]} : vector<32x7xf32> to vector<32x1xf32>
    %c0_156 = arith.constant 0 : index
    %c2_157 = arith.constant 2 : index
    %212 = vector.load %arg9[%c0_156, %c2_157] : memref<32x134xf32, #tpu.memory_space<vmem>>, vector<32x128xf32>
    %213 = vector.broadcast %211 : vector<32x1xf32> to vector<32x128xf32>
    %214 = arith.mulf %213, %212 : vector<32x128xf32>
    %215 = arith.addf %210, %214 : vector<32x128xf32>
    %216 = vector.extract_strided_slice %15 {offsets = [0, 3], sizes = [32, 1], strides = [1, 1]} : vector<32x7xf32> to vector<32x1xf32>
    %c0_158 = arith.constant 0 : index
    %c3_159 = arith.constant 3 : index
    %217 = vector.load %arg9[%c0_158, %c3_159] : memref<32x134xf32, #tpu.memory_space<vmem>>, vector<32x128xf32>
    %218 = vector.broadcast %216 : vector<32x1xf32> to vector<32x128xf32>
    %219 = arith.mulf %218, %217 : vector<32x128xf32>
    %220 = arith.addf %215, %219 : vector<32x128xf32>
    %221 = vector.extract_strided_slice %15 {offsets = [0, 4], sizes = [32, 1], strides = [1, 1]} : vector<32x7xf32> to vector<32x1xf32>
    %c0_160 = arith.constant 0 : index
    %c4_161 = arith.constant 4 : index
    %222 = vector.load %arg9[%c0_160, %c4_161] : memref<32x134xf32, #tpu.memory_space<vmem>>, vector<32x128xf32>
    %223 = vector.broadcast %221 : vector<32x1xf32> to vector<32x128xf32>
    %224 = arith.mulf %223, %222 : vector<32x128xf32>
    %225 = arith.addf %220, %224 : vector<32x128xf32>
    %226 = vector.extract_strided_slice %15 {offsets = [0, 5], sizes = [32, 1], strides = [1, 1]} : vector<32x7xf32> to vector<32x1xf32>
    %c0_162 = arith.constant 0 : index
    %c5_163 = arith.constant 5 : index
    %227 = vector.load %arg9[%c0_162, %c5_163] : memref<32x134xf32, #tpu.memory_space<vmem>>, vector<32x128xf32>
    %228 = vector.broadcast %226 : vector<32x1xf32> to vector<32x128xf32>
    %229 = arith.mulf %228, %227 : vector<32x128xf32>
    %230 = arith.addf %225, %229 : vector<32x128xf32>
    %231 = vector.extract_strided_slice %15 {offsets = [0, 6], sizes = [32, 1], strides = [1, 1]} : vector<32x7xf32> to vector<32x1xf32>
    %c0_164 = arith.constant 0 : index
    %c6_165 = arith.constant 6 : index
    %232 = vector.load %arg9[%c0_164, %c6_165] : memref<32x134xf32, #tpu.memory_space<vmem>>, vector<32x128xf32>
    %233 = vector.broadcast %231 : vector<32x1xf32> to vector<32x128xf32>
    %234 = arith.mulf %233, %232 : vector<32x128xf32>
    %235 = arith.addf %230, %234 : vector<32x128xf32>
    %cst_166 = arith.constant dense<0.000000e+00> : vector<128xf32>
    %236 = vector.multi_reduction <add>, %235, %cst_166 [0] : vector<32x128xf32> to vector<128xf32>
    %237 = vector.shape_cast %236 : vector<128xf32> to vector<1x128xf32>
    %c0_167 = arith.constant 0 : index
    %c2_168 = arith.constant 2 : index
    %238 = vector.load %arg5[%c0_167, %c2_168] : memref<32x3xf32, #tpu.memory_space<vmem>>, vector<1x1xf32>
    %239 = vector.broadcast %238 : vector<1x1xf32> to vector<1x128xf32>
    %240 = arith.addf %237, %239 : vector<1x128xf32>
    %c1_169 = arith.constant 1 : index
    %c0_170 = arith.constant 0 : index
    %241 = vector.load %arg6[%c1_169, %c0_170] : memref<2x128xf32, #tpu.memory_space<vmem>>, vector<1x128xf32>
    tpu.vector_store %arg6[%c1_169, %c0_170], %240 {strides = array<i32>} : memref<2x128xf32, #tpu.memory_space<vmem>>, vector<1x128xf32>,
    return
  }
  func.func @transform_0(%arg0: i32) -> (i32, i32) {
    %c0_i32 = arith.constant 0 : i32
    %c0_i32_0 = arith.constant 0 : i32
    return %arg0, %c0_i32 : i32, i32
  }
  func.func @transform_1(%arg0: i32) -> (i32, i32) {
    %c0_i32 = arith.constant 0 : i32
    %c0_i32_0 = arith.constant 0 : i32
    %c0_i32_1 = arith.constant 0 : i32
    return %c0_i32, %c0_i32_0 : i32, i32
  }
  func.func @transform_2(%arg0: i32) -> (i32, i32, i32) {
    %c0_i32 = arith.constant 0 : i32
    %c0_i32_0 = arith.constant 0 : i32
    %c0_i32_1 = arith.constant 0 : i32
    %c0_i32_2 = arith.constant 0 : i32
    return %c0_i32, %c0_i32_0, %c0_i32_1 : i32, i32, i32
  }
  func.func @transform_3(%arg0: i32) -> (i32, i32) {
    %c0_i32 = arith.constant 0 : i32
    %c0_i32_0 = arith.constant 0 : i32
    %c0_i32_1 = arith.constant 0 : i32
    return %c0_i32, %c0_i32_0 : i32, i32
  }
  func.func @transform_4(%arg0: i32) -> (i32, i32) {
    %c0_i32 = arith.constant 0 : i32
    %c0_i32_0 = arith.constant 0 : i32
    %c0_i32_1 = arith.constant 0 : i32
    return %c0_i32, %c0_i32_0 : i32, i32
  }
  func.func @transform_5(%arg0: i32) -> (i32, i32) {
    %c0_i32 = arith.constant 0 : i32
    %c0_i32_0 = arith.constant 0 : i32
    return %arg0, %c0_i32 : i32, i32
  }
}

</mosaic_0001>

<llo_original>
// kernel: tpu_custom_call.1
$region0: #{tpu_custom_call.1}
  #allocation0 [shape = 'u32[]', space=smem, size = 0x4, offset = 0x4, fixed_abs, tag = 'smem constant byte address 0x4 - core index']
  #allocation1 [shape = 'u32[144,128]{1,0:T(1,128)}', space=vmem, size = 0x12000, scoped, tag = 'internal scratch']
  #allocation2 [shape = 'f32[1,134]{1,0:T(1,128)}', space=vmem, size = 0x400, scoped, tag = 'scratch operand']
  #allocation3 [shape = 'f32[32,134]{1,0:T(8,128)}', space=vmem, size = 0x8000, scoped, tag = 'scratch operand']
  #allocation4 [shape = 'f32[32,134]{1,0:T(8,128)}', space=vmem, size = 0x8000, scoped, tag = 'scratch operand']
  #allocation5 [shape = 'f32[256,128]{1,0:T(8,128)}', space=vmem, size = 0x20000, scoped, tag = 'scratch operand']
  %s0 = inlined_call_operand.vmem [shape: f32[2,128], index: 0, kind: input, shape index: {}]
  %s1 = inlined_call_operand.vmem [shape: f32[32,7], index: 1, kind: input, shape index: {}]
  %s2 = inlined_call_operand.vmem [shape: f32[1,32,256], index: 2, kind: input, shape index: {}]
  %s3 = inlined_call_operand.vmem [shape: f32[32,7], index: 3, kind: input, shape index: {}]
  %s4 = inlined_call_operand.vmem [shape: f32[32,3], index: 4, kind: input, shape index: {}]
  %s5 = inlined_call_operand.hbm [shape: f32[2,128], index: 5, kind: output, shape index: {}]
  %s6 = sld [smem:[#allocation0]]
  $region30: #{tpu_custom_call.1} parent=0
    _
  %s8 = ssub.s32 1, %s6
  %s9 = scalar_select 0, %s8, %s6
  $region1: #{tpu_custom_call.1} parent=0
    #allocation6 [shape = 'u8[1024]{0}', space=vmem, size = 0x400, scoped, tag = 'output window, operand 0, single buffered']
    #allocation7 [shape = 's32[1]{0}', space=sflag, size = 0x4, scoped, tag = 'scoped memory for tpu_custom_call.1']
    %10 = vsyncpa [#allocation7], 0
    // Predicated region
    $region2: #{tpu_custom_call.1} parent=1 // pred_check
      _
    $region3: #{tpu_custom_call.1} parent=1 // pred_check_branch
      %12 = sbr.rel (0) target = $region5
    $region4: #{tpu_custom_call.1} parent=1 // pred_region
      _
    $region5: #{tpu_custom_call.1} parent=1 // pred_fallthru
      _
    // Predicated region
    $region6: #{tpu_custom_call.1} parent=1 // pred_check
      _
    $region7: #{tpu_custom_call.1} parent=1 // pred_check_branch
      %14 = sbr.rel (0) target = $region9
    $region8: #{tpu_custom_call.1} parent=1 // pred_region
      _
    $region9: #{tpu_custom_call.1} parent=1 // pred_fallthru
      _
    // Predicated region
    $region10: #{tpu_custom_call.1} parent=1 // pred_check
      _
    $region11: #{tpu_custom_call.1} parent=1 // pred_check_branch
      %16 = sbr.rel (0) target = $region13
    $region12: #{tpu_custom_call.1} parent=1 // pred_region
      _
    $region13: #{tpu_custom_call.1} parent=1 // pred_fallthru
      _
    // Predicated region
    $region14: #{tpu_custom_call.1} parent=1 // pred_check
      _
    $region15: #{tpu_custom_call.1} parent=1 // pred_check_branch
      %18 = sbr.rel (0) target = $region17
    $region16: #{tpu_custom_call.1} parent=1 // pred_region
      _
    $region17: #{tpu_custom_call.1} parent=1 // pred_fallthru
      _
    // Predicated region
    $region18: #{tpu_custom_call.1} parent=1 // pred_check
      _
    $region19: #{tpu_custom_call.1} parent=1 // pred_check_branch
      %20 = sbr.rel (0) target = $region21
    $region20: #{tpu_custom_call.1} parent=1 // pred_region
      _
    $region21: #{tpu_custom_call.1} parent=1 // pred_fallthru
      _
    %v21 = vlaneseq
    %vm22 = vcmp.ge.s32.totalorder %v21, 0
    %vm23 = vcmp.lt.s32.totalorder %v21, 3
    %vm24 = vmand %vm22, %vm23
    %25 = vst.msk [vmem:[#allocation2] sm:$0x1] %vm24, 0.0
    %vm26 = vcmp.ge.s32.totalorder %v21, 3
    %vm27 = vcmp.lt.s32.totalorder %v21, 6
    %vm28 = vmand %vm26, %vm27
    %29 = vst.msk [vmem:[#allocation2 + $0x1] sm:$0x1] %vm28, 0.0
    %vm30 = vcmask 23552
    %31 = vst.msk [vmem:[#allocation3] sm:$0xff] %vm30, 0.0
    %32 = vst.msk [vmem:[#allocation3 + $0x10] sm:$0xff] %vm30, 0.0
    %33 = vst.msk [vmem:[#allocation3 + $0x20] sm:$0xff] %vm30, 0.0
    %34 = vst.msk [vmem:[#allocation3 + $0x30] sm:$0xff] %vm30, 0.0
    %vm35 = vcmask 48152
    %36 = vst.msk [vmem:[#allocation3 + $0x8] sm:$0xff] %vm35, 0.0
    %37 = vst.msk [vmem:[#allocation3 + $0x18] sm:$0xff] %vm35, 0.0
    %38 = vst.msk [vmem:[#allocation3 + $0x28] sm:$0xff] %vm35, 0.0
    %39 = vst.msk [vmem:[#allocation3 + $0x38] sm:$0xff] %vm35, 0.0
    %40 = vst.msk [vmem:[#allocation4] sm:$0xff] %vm30, 0.0
    %41 = vst.msk [vmem:[#allocation4 + $0x10] sm:$0xff] %vm30, 0.0
    %42 = vst.msk [vmem:[#allocation4 + $0x20] sm:$0xff] %vm30, 0.0
    %43 = vst.msk [vmem:[#allocation4 + $0x30] sm:$0xff] %vm30, 0.0
    %44 = vst.msk [vmem:[#allocation4 + $0x8] sm:$0xff] %vm35, 0.0
    %45 = vst.msk [vmem:[#allocation4 + $0x18] sm:$0xff] %vm35, 0.0
    %46 = vst.msk [vmem:[#allocation4 + $0x28] sm:$0xff] %vm35, 0.0
    %47 = vst.msk [vmem:[#allocation4 + $0x38] sm:$0xff] %vm35, 0.0
    %48 = vst [vmem:[#allocation5 + $0xe0] sm:$0xff] 0.0
    %49 = vst [vmem:[#allocation5 + $0xe8] sm:$0xff] 0.0
    %50 = vst [vmem:[#allocation5 + $0xf0] sm:$0xff] 0.0
    %51 = vst [vmem:[#allocation5 + $0xf8] sm:$0xff] 0.0
    %v52 = vld [vmem:[%s1] sm:$0xff]
    %v53 = vld [vmem:[%s1 + $0x8] sm:$0xff]
    %v54 = vld [vmem:[%s1 + $0x10] sm:$0xff]
    %v55 = vld [vmem:[%s1 + $0x18] sm:$0xff]
    %v56 = vld [vmem:[%s3] sm:$0xff]
    %v57 = vld [vmem:[%s3 + $0x8] sm:$0xff]
    %v58 = vld [vmem:[%s3 + $0x10] sm:$0xff]
    %v59 = vld [vmem:[%s3 + $0x18] sm:$0xff]
    %v60 = vld [vmem:[%s0] sm:$0x1]
    %v63 = vunpack.c.l.s4 1966171168
    %v64 = vunpack.c.0.s8 %v63
    %v65 = vlaneseq
    %v66 = vshrl.u32 %v65, 7
    %v67 = vsub.s32 %v64, %v66
    %v68 = vrot.slane %v60, %v67
    %v70 = vunpack.c.l.s4 1966171168
    %v71 = vunpack.c.0.s8 %v70
    %v72 = vlaneseq
    %v73 = vshrl.u32 %v72, 7
    %v74 = vsub.s32 %v71, %v73
    %v75 = vrot.slane %v68, %v74
    %76 = vrot.lane.b32.xlu0 %v75, 3
    %v77 = vpop.permute.xlu0 %76
    %v78 = vrot.slane %v77, 7
    %v79 = vsel %vm30, %v78, %v77
    %vm81 = vcmp.lt.s32.totalorder %v21, 131
    %vm82 = vmand %vm26, %vm81
    %83 = vst.msk [vmem:[#allocation2] sm:$0x3] %vm82, %v79
    %v84 = vld [vmem:[#allocation2] sm:$0x1]
    %86 = vset.pattern.permute.xlu0 0
    %87 = vperm.xlu0 %86, %v52
    %v88 = vpop.permute.xlu0 %87
    %91 = vset.pattern.permute.xlu0 0
    %92 = vperm.xlu0 %91, %v53
    %v93 = vpop.permute.xlu0 %92
    %96 = vset.pattern.permute.xlu0 0
    %97 = vperm.xlu0 %96, %v54
    %v98 = vpop.permute.xlu0 %97
    %101 = vset.pattern.permute.xlu0 0
    %102 = vperm.xlu0 %101, %v55
    %v103 = vpop.permute.xlu0 %102
    %v106 = vlaneseq
    %v107 = vshrl.u32 %v106, 7
    %v108 = vsub.s32 0, %v107
    %v109 = vrot.slane %v84, %v108
    %v111 = vmul.f32 %v88, %v109
    %v112 = vmul.f32 %v93, %v109
    %v113 = vmul.f32 %v98, %v109
    %v114 = vmul.f32 %v103, %v109
    %v115 = vld [vmem:[#allocation2] sm:$0x3]
    %116 = vset.pattern.permute.xlu0 1
    %117 = vperm.xlu0 %116, %v52
    %v118 = vpop.permute.xlu0 %117
    %120 = vset.pattern.permute.xlu0 1
    %121 = vperm.xlu0 %120, %v53
    %v122 = vpop.permute.xlu0 %121
    %124 = vset.pattern.permute.xlu0 1
    %125 = vperm.xlu0 %124, %v54
    %v126 = vpop.permute.xlu0 %125
    %128 = vset.pattern.permute.xlu0 1
    %129 = vperm.xlu0 %128, %v55
    %v130 = vpop.permute.xlu0 %129
    %v133 = vlaneseq
    %v134 = vshrl.u32 %v133, 7
    %v135 = vsub.s32 0, %v134
    %v136 = vrot.slane %v115, %v135
    %v137 = vlaneseq
    %v138 = vshrl.u32 %v137, 7
    %v139 = vsub.s32 1, %v138
    %v140 = vrot.slane %v115, %v139
    %v143 = vmul.f32 %v118, %v136
    %v144 = vmul.f32 %v118, %v140
    %v145 = vmul.f32 %v122, %v136
    %v146 = vmul.f32 %v122, %v140
    %v147 = vmul.f32 %v126, %v136
    %v148 = vmul.f32 %v126, %v140
    %v149 = vmul.f32 %v130, %v136
    %v150 = vmul.f32 %v130, %v140
    %159 = vrot.lane.b32.xlu0 %v143, 127
    %v160 = vpop.permute.xlu0 %159
    %161 = vrot.lane.b32.xlu0 %v144, 127
    %v162 = vpop.permute.xlu0 %161
    %163 = vrot.lane.b32.xlu0 %v145, 127
    %v164 = vpop.permute.xlu0 %163
    %165 = vrot.lane.b32.xlu0 %v146, 127
    %v166 = vpop.permute.xlu0 %165
    %167 = vrot.lane.b32.xlu0 %v147, 127
    %v168 = vpop.permute.xlu0 %167
    %169 = vrot.lane.b32.xlu0 %v148, 127
    %v170 = vpop.permute.xlu0 %169
    %171 = vrot.lane.b32.xlu0 %v149, 127
    %v172 = vpop.permute.xlu0 %171
    %173 = vrot.lane.b32.xlu0 %v150, 127
    %v174 = vpop.permute.xlu0 %173
    %vm175 = vcmask 1039360
    %v176 = vsel %vm175, %v160, %v162
    %v177 = vsel %vm175, %v164, %v166
    %v178 = vsel %vm175, %v168, %v170
    %v179 = vsel %vm175, %v172, %v174
    %v184 = vadd.f32 %v111, %v176
    %v185 = vadd.f32 %v112, %v177
    %v186 = vadd.f32 %v113, %v178
    %v187 = vadd.f32 %v114, %v179
    %188 = vset.pattern.permute.xlu0 2
    %189 = vperm.xlu0 %188, %v52
    %v190 = vpop.permute.xlu0 %189
    %192 = vset.pattern.permute.xlu0 2
    %193 = vperm.xlu0 %192, %v53
    %v194 = vpop.permute.xlu0 %193
    %196 = vset.pattern.permute.xlu0 2
    %197 = vperm.xlu0 %196, %v54
    %v198 = vpop.permute.xlu0 %197
    %200 = vset.pattern.permute.xlu0 2
    %201 = vperm.xlu0 %200, %v55
    %v202 = vpop.permute.xlu0 %201
    %v204 = vmul.f32 %v190, %v136
    %v205 = vmul.f32 %v190, %v140
    %v206 = vmul.f32 %v194, %v136
    %v207 = vmul.f32 %v194, %v140
    %v208 = vmul.f32 %v198, %v136
    %v209 = vmul.f32 %v198, %v140
    %v210 = vmul.f32 %v202, %v136
    %v211 = vmul.f32 %v202, %v140
    %220 = vrot.lane.b32.xlu0 %v204, 126
    %v221 = vpop.permute.xlu0 %220
    %222 = vrot.lane.b32.xlu0 %v205, 126
    %v223 = vpop.permute.xlu0 %222
    %224 = vrot.lane.b32.xlu0 %v206, 126
    %v225 = vpop.permute.xlu0 %224
    %226 = vrot.lane.b32.xlu0 %v207, 126
    %v227 = vpop.permute.xlu0 %226
    %228 = vrot.lane.b32.xlu0 %v208, 126
    %v229 = vpop.permute.xlu0 %228
    %230 = vrot.lane.b32.xlu0 %v209, 126
    %v231 = vpop.permute.xlu0 %230
    %232 = vrot.lane.b32.xlu0 %v210, 126
    %v233 = vpop.permute.xlu0 %232
    %234 = vrot.lane.b32.xlu0 %v211, 126
    %v235 = vpop.permute.xlu0 %234
    %vm236 = vcmask 1031168
    %v237 = vsel %vm236, %v221, %v223
    %v238 = vsel %vm236, %v225, %v227
    %v239 = vsel %vm236, %v229, %v231
    %v240 = vsel %vm236, %v233, %v235
    %v245 = vadd.f32 %v184, %v237
    %v246 = vadd.f32 %v185, %v238
    %v247 = vadd.f32 %v186, %v239
    %v248 = vadd.f32 %v187, %v240
    %249 = vset.pattern.permute.xlu0 3
    %250 = vperm.xlu0 %249, %v52
    %v251 = vpop.permute.xlu0 %250
    %253 = vset.pattern.permute.xlu0 3
    %254 = vperm.xlu0 %253, %v53
    %v255 = vpop.permute.xlu0 %254
    %257 = vset.pattern.permute.xlu0 3
    %258 = vperm.xlu0 %257, %v54
    %v259 = vpop.permute.xlu0 %258
    %261 = vset.pattern.permute.xlu0 3
    %262 = vperm.xlu0 %261, %v55
    %v263 = vpop.permute.xlu0 %262
    %v265 = vmul.f32 %v251, %v136
    %v266 = vmul.f32 %v251, %v140
    %v267 = vmul.f32 %v255, %v136
    %v268 = vmul.f32 %v255, %v140
    %v269 = vmul.f32 %v259, %v136
    %v270 = vmul.f32 %v259, %v140
    %v271 = vmul.f32 %v263, %v136
    %v272 = vmul.f32 %v263, %v140
    %281 = vrot.lane.b32.xlu0 %v265, 125
    %v282 = vpop.permute.xlu0 %281
    %283 = vrot.lane.b32.xlu0 %v266, 125
    %v284 = vpop.permute.xlu0 %283
    %285 = vrot.lane.b32.xlu0 %v267, 125
    %v286 = vpop.permute.xlu0 %285
    %287 = vrot.lane.b32.xlu0 %v268, 125
    %v288 = vpop.permute.xlu0 %287
    %289 = vrot.lane.b32.xlu0 %v269, 125
    %v290 = vpop.permute.xlu0 %289
    %291 = vrot.lane.b32.xlu0 %v270, 125
    %v292 = vpop.permute.xlu0 %291
    %293 = vrot.lane.b32.xlu0 %v271, 125
    %v294 = vpop.permute.xlu0 %293
    %295 = vrot.lane.b32.xlu0 %v272, 125
    %v296 = vpop.permute.xlu0 %295
    %vm297 = vcmask 1022976
    %v298 = vsel %vm297, %v282, %v284
    %v299 = vsel %vm297, %v286, %v288
    %v300 = vsel %vm297, %v290, %v292
    %v301 = vsel %vm297, %v294, %v296
    %v306 = vadd.f32 %v245, %v298
    %v307 = vadd.f32 %v246, %v299
    %v308 = vadd.f32 %v247, %v300
    %v309 = vadd.f32 %v248, %v301
    %310 = vset.pattern.permute.xlu0 4
    %311 = vperm.xlu0 %310, %v52
    %v312 = vpop.permute.xlu0 %311
    %314 = vset.pattern.permute.xlu0 4
    %315 = vperm.xlu0 %314, %v53
    %v316 = vpop.permute.xlu0 %315
    %318 = vset.pattern.permute.xlu0 4
    %319 = vperm.xlu0 %318, %v54
    %v320 = vpop.permute.xlu0 %319
    %322 = vset.pattern.permute.xlu0 4
    %323 = vperm.xlu0 %322, %v55
    %v324 = vpop.permute.xlu0 %323
    %v326 = vmul.f32 %v312, %v136
    %v327 = vmul.f32 %v312, %v140
    %v328 = vmul.f32 %v316, %v136
    %v329 = vmul.f32 %v316, %v140
    %v330 = vmul.f32 %v320, %v136
    %v331 = vmul.f32 %v320, %v140
    %v332 = vmul.f32 %v324, %v136
    %v333 = vmul.f32 %v324, %v140
    %342 = vrot.lane.b32.xlu0 %v326, 124
    %v343 = vpop.permute.xlu0 %342
    %344 = vrot.lane.b32.xlu0 %v327, 124
    %v345 = vpop.permute.xlu0 %344
    %346 = vrot.lane.b32.xlu0 %v328, 124
    %v347 = vpop.permute.xlu0 %346
    %348 = vrot.lane.b32.xlu0 %v329, 124
    %v349 = vpop.permute.xlu0 %348
    %350 = vrot.lane.b32.xlu0 %v330, 124
    %v351 = vpop.permute.xlu0 %350
    %352 = vrot.lane.b32.xlu0 %v331, 124
    %v353 = vpop.permute.xlu0 %352
    %354 = vrot.lane.b32.xlu0 %v332, 124
    %v355 = vpop.permute.xlu0 %354
    %356 = vrot.lane.b32.xlu0 %v333, 124
    %v357 = vpop.permute.xlu0 %356
    %vm358 = vcmask 1014784
    %v359 = vsel %vm358, %v343, %v345
    %v360 = vsel %vm358, %v347, %v349
    %v361 = vsel %vm358, %v351, %v353
    %v362 = vsel %vm358, %v355, %v357
    %v367 = vadd.f32 %v306, %v359
    %v368 = vadd.f32 %v307, %v360
    %v369 = vadd.f32 %v308, %v361
    %v370 = vadd.f32 %v309, %v362
    %371 = vset.pattern.permute.xlu0 5
    %372 = vperm.xlu0 %371, %v52
    %v373 = vpop.permute.xlu0 %372
    %375 = vset.pattern.permute.xlu0 5
    %376 = vperm.xlu0 %375, %v53
    %v377 = vpop.permute.xlu0 %376
    %379 = vset.pattern.permute.xlu0 5
    %380 = vperm.xlu0 %379, %v54
    %v381 = vpop.permute.xlu0 %380
    %383 = vset.pattern.permute.xlu0 5
    %384 = vperm.xlu0 %383, %v55
    %v385 = vpop.permute.xlu0 %384
    %v387 = vmul.f32 %v373, %v136
    %v388 = vmul.f32 %v373, %v140
    %v389 = vmul.f32 %v377, %v136
    %v390 = vmul.f32 %v377, %v140
    %v391 = vmul.f32 %v381, %v136
    %v392 = vmul.f32 %v381, %v140
    %v393 = vmul.f32 %v385, %v136
    %v394 = vmul.f32 %v385, %v140
    %403 = vrot.lane.b32.xlu0 %v387, 123
    %v404 = vpop.permute.xlu0 %403
    %405 = vrot.lane.b32.xlu0 %v388, 123
    %v406 = vpop.permute.xlu0 %405
    %407 = vrot.lane.b32.xlu0 %v389, 123
    %v408 = vpop.permute.xlu0 %407
    %409 = vrot.lane.b32.xlu0 %v390, 123
    %v410 = vpop.permute.xlu0 %409
    %411 = vrot.lane.b32.xlu0 %v391, 123
    %v412 = vpop.permute.xlu0 %411
    %413 = vrot.lane.b32.xlu0 %v392, 123
    %v414 = vpop.permute.xlu0 %413
    %415 = vrot.lane.b32.xlu0 %v393, 123
    %v416 = vpop.permute.xlu0 %415
    %417 = vrot.lane.b32.xlu0 %v394, 123
    %v418 = vpop.permute.xlu0 %417
    %vm419 = vcmask 1006592
    %v420 = vsel %vm419, %v404, %v406
    %v421 = vsel %vm419, %v408, %v410
    %v422 = vsel %vm419, %v412, %v414
    %v423 = vsel %vm419, %v416, %v418
    %v428 = vadd.f32 %v367, %v420
    %v429 = vadd.f32 %v368, %v421
    %v430 = vadd.f32 %v369, %v422
    %v431 = vadd.f32 %v370, %v423
    %432 = vset.pattern.permute.xlu0 6
    %433 = vperm.xlu0 %432, %v52
    %v434 = vpop.permute.xlu0 %433
    %436 = vset.pattern.permute.xlu0 6
    %437 = vperm.xlu0 %436, %v53
    %v438 = vpop.permute.xlu0 %437
    %440 = vset.pattern.permute.xlu0 6
    %441 = vperm.xlu0 %440, %v54
    %v442 = vpop.permute.xlu0 %441
    %444 = vset.pattern.permute.xlu0 6
    %445 = vperm.xlu0 %444, %v55
    %v446 = vpop.permute.xlu0 %445
    %v448 = vmul.f32 %v434, %v136
    %v449 = vmul.f32 %v434, %v140
    %v450 = vmul.f32 %v438, %v136
    %v451 = vmul.f32 %v438, %v140
    %v452 = vmul.f32 %v442, %v136
    %v453 = vmul.f32 %v442, %v140
    %v454 = vmul.f32 %v446, %v136
    %v455 = vmul.f32 %v446, %v140
    %464 = vrot.lane.b32.xlu0 %v448, 122
    %v465 = vpop.permute.xlu0 %464
    %466 = vrot.lane.b32.xlu0 %v449, 122
    %v467 = vpop.permute.xlu0 %466
    %468 = vrot.lane.b32.xlu0 %v450, 122
    %v469 = vpop.permute.xlu0 %468
    %470 = vrot.lane.b32.xlu0 %v451, 122
    %v471 = vpop.permute.xlu0 %470
    %472 = vrot.lane.b32.xlu0 %v452, 122
    %v473 = vpop.permute.xlu0 %472
    %474 = vrot.lane.b32.xlu0 %v453, 122
    %v475 = vpop.permute.xlu0 %474
    %476 = vrot.lane.b32.xlu0 %v454, 122
    %v477 = vpop.permute.xlu0 %476
    %478 = vrot.lane.b32.xlu0 %v455, 122
    %v479 = vpop.permute.xlu0 %478
    %vm480 = vcmask 998400
    %v481 = vsel %vm480, %v465, %v467
    %v482 = vsel %vm480, %v469, %v471
    %v483 = vsel %vm480, %v473, %v475
    %v484 = vsel %vm480, %v477, %v479
    %v489 = vadd.f32 %v428, %v481
    %v490 = vadd.f32 %v429, %v482
    %v491 = vadd.f32 %v430, %v483
    %v492 = vadd.f32 %v431, %v484
    %v493 = vld [vmem:[%s4] sm:$0xff]
    %v494 = vld [vmem:[%s4 + $0x8] sm:$0xff]
    %v495 = vld [vmem:[%s4 + $0x10] sm:$0xff]
    %v496 = vld [vmem:[%s4 + $0x18] sm:$0xff]
    %498 = vset.pattern.permute.xlu0 0
    %499 = vperm.xlu0 %498, %v493
    %v500 = vpop.permute.xlu0 %499
    %503 = vset.pattern.permute.xlu0 0
    %504 = vperm.xlu0 %503, %v494
    %v505 = vpop.permute.xlu0 %504
    %508 = vset.pattern.permute.xlu0 0
    %509 = vperm.xlu0 %508, %v495
    %v510 = vpop.permute.xlu0 %509
    %513 = vset.pattern.permute.xlu0 0
    %514 = vperm.xlu0 %513, %v496
    %v515 = vpop.permute.xlu0 %514
    %v517 = vadd.f32 %v489, %v500
    %v518 = vadd.f32 %v490, %v505
    %v519 = vadd.f32 %v491, %v510
    %v520 = vadd.f32 %v492, %v515
    %v521 = vmax.f32 %v517, 0.0
    %v522 = vmax.f32 %v518, 0.0
    %v523 = vmax.f32 %v519, 0.0
    %v524 = vmax.f32 %v520, 0.0
    %529 = vrot.lane.b32.xlu0 %v521, 3
    %v530 = vpop.permute.xlu0 %529
    %531 = vrot.lane.b32.xlu0 %v522, 3
    %v532 = vpop.permute.xlu0 %531
    %533 = vrot.lane.b32.xlu0 %v523, 3
    %v534 = vpop.permute.xlu0 %533
    %535 = vrot.lane.b32.xlu0 %v524, 3
    %v536 = vpop.permute.xlu0 %535
    %vm541 = vcmask 1047576
    %542 = vst.msk [vmem:[#allocation3] sm:$0xff] %vm541, %v530
    %543 = vst.msk [vmem:[#allocation3 + $0x8] sm:$0xff] %vm30, %v530
    %544 = vst.msk [vmem:[#allocation3 + $0x10] sm:$0xff] %vm541, %v532
    %545 = vst.msk [vmem:[#allocation3 + $0x18] sm:$0xff] %vm30, %v532
    %546 = vst.msk [vmem:[#allocation3 + $0x20] sm:$0xff] %vm541, %v534
    %547 = vst.msk [vmem:[#allocation3 + $0x28] sm:$0xff] %vm30, %v534
    %548 = vst.msk [vmem:[#allocation3 + $0x30] sm:$0xff] %vm541, %v536
    %549 = vst.msk [vmem:[#allocation3 + $0x38] sm:$0xff] %vm30, %v536
    %v550 = vld [vmem:[#allocation3] sm:$0xff]
    %v551 = vld [vmem:[#allocation3 + $0x10] sm:$0xff]
    %v552 = vld [vmem:[#allocation3 + $0x20] sm:$0xff]
    %v553 = vld [vmem:[#allocation3 + $0x30] sm:$0xff]
    %554 = vst [vmem:[#allocation5] sm:$0xff] %v550
    %555 = vst [vmem:[#allocation5 + $0x8] sm:$0xff] %v551
    %556 = vst [vmem:[#allocation5 + $0x10] sm:$0xff] %v552
    %557 = vst [vmem:[#allocation5 + $0x18] sm:$0xff] %v553
    %v558 = vld [vmem:[#allocation3] sm:$0xff]
    %v559 = vld [vmem:[#allocation3 + $0x8] sm:$0xff]
    %v560 = vld [vmem:[#allocation3 + $0x10] sm:$0xff]
    %v561 = vld [vmem:[#allocation3 + $0x18] sm:$0xff]
    %v562 = vld [vmem:[#allocation3 + $0x20] sm:$0xff]
    %v563 = vld [vmem:[#allocation3 + $0x28] sm:$0xff]
    %v564 = vld [vmem:[#allocation3 + $0x30] sm:$0xff]
    %v565 = vld [vmem:[#allocation3 + $0x38] sm:$0xff]
    %574 = vrot.lane.b32.xlu0 %v558, 127
    %v575 = vpop.permute.xlu0 %574
    %576 = vrot.lane.b32.xlu0 %v559, 127
    %v577 = vpop.permute.xlu0 %576
    %578 = vrot.lane.b32.xlu0 %v560, 127
    %v579 = vpop.permute.xlu0 %578
    %580 = vrot.lane.b32.xlu0 %v561, 127
    %v581 = vpop.permute.xlu0 %580
    %582 = vrot.lane.b32.xlu0 %v562, 127
    %v583 = vpop.permute.xlu0 %582
    %584 = vrot.lane.b32.xlu0 %v563, 127
    %v585 = vpop.permute.xlu0 %584
    %586 = vrot.lane.b32.xlu0 %v564, 127
    %v587 = vpop.permute.xlu0 %586
    %588 = vrot.lane.b32.xlu0 %v565, 127
    %v589 = vpop.permute.xlu0 %588
    %v590 = vsel %vm175, %v575, %v577
    %v591 = vsel %vm175, %v579, %v581
    %v592 = vsel %vm175, %v583, %v585
    %v593 = vsel %vm175, %v587, %v589
    %598 = vst [vmem:[#allocation5 + $0x20] sm:$0xff] %v590
    %599 = vst [vmem:[#allocation5 + $0x28] sm:$0xff] %v591
    %600 = vst [vmem:[#allocation5 + $0x30] sm:$0xff] %v592
    %601 = vst [vmem:[#allocation5 + $0x38] sm:$0xff] %v593
    %v602 = vld [vmem:[#allocation3] sm:$0xff]
    %v603 = vld [vmem:[#allocation3 + $0x8] sm:$0xff]
    %v604 = vld [vmem:[#allocation3 + $0x10] sm:$0xff]
    %v605 = vld [vmem:[#allocation3 + $0x18] sm:$0xff]
    %v606 = vld [vmem:[#allocation3 + $0x20] sm:$0xff]
    %v607 = vld [vmem:[#allocation3 + $0x28] sm:$0xff]
    %v608 = vld [vmem:[#allocation3 + $0x30] sm:$0xff]
    %v609 = vld [vmem:[#allocation3 + $0x38] sm:$0xff]
    %618 = vrot.lane.b32.xlu0 %v602, 126
    %v619 = vpop.permute.xlu0 %618
    %620 = vrot.lane.b32.xlu0 %v603, 126
    %v621 = vpop.permute.xlu0 %620
    %622 = vrot.lane.b32.xlu0 %v604, 126
    %v623 = vpop.permute.xlu0 %622
    %624 = vrot.lane.b32.xlu0 %v605, 126
    %v625 = vpop.permute.xlu0 %624
    %626 = vrot.lane.b32.xlu0 %v606, 126
    %v627 = vpop.permute.xlu0 %626
    %628 = vrot.lane.b32.xlu0 %v607, 126
    %v629 = vpop.permute.xlu0 %628
    %630 = vrot.lane.b32.xlu0 %v608, 126
    %v631 = vpop.permute.xlu0 %630
    %632 = vrot.lane.b32.xlu0 %v609, 126
    %v633 = vpop.permute.xlu0 %632
    %v634 = vsel %vm236, %v619, %v621
    %v635 = vsel %vm236, %v623, %v625
    %v636 = vsel %vm236, %v627, %v629
    %v637 = vsel %vm236, %v631, %v633
    %642 = vst [vmem:[#allocation5 + $0x40] sm:$0xff] %v634
    %643 = vst [vmem:[#allocation5 + $0x48] sm:$0xff] %v635
    %644 = vst [vmem:[#allocation5 + $0x50] sm:$0xff] %v636
    %645 = vst [vmem:[#allocation5 + $0x58] sm:$0xff] %v637
    %v646 = vld [vmem:[#allocation3] sm:$0xff]
    %v647 = vld [vmem:[#allocation3 + $0x8] sm:$0xff]
    %v648 = vld [vmem:[#allocation3 + $0x10] sm:$0xff]
    %v649 = vld [vmem:[#allocation3 + $0x18] sm:$0xff]
    %v650 = vld [vmem:[#allocation3 + $0x20] sm:$0xff]
    %v651 = vld [vmem:[#allocation3 + $0x28] sm:$0xff]
    %v652 = vld [vmem:[#allocation3 + $0x30] sm:$0xff]
    %v653 = vld [vmem:[#allocation3 + $0x38] sm:$0xff]
    %662 = vrot.lane.b32.xlu0 %v646, 125
    %v663 = vpop.permute.xlu0 %662
    %664 = vrot.lane.b32.xlu0 %v647, 125
    %v665 = vpop.permute.xlu0 %664
    %666 = vrot.lane.b32.xlu0 %v648, 125
    %v667 = vpop.permute.xlu0 %666
    %668 = vrot.lane.b32.xlu0 %v649, 125
    %v669 = vpop.permute.xlu0 %668
    %670 = vrot.lane.b32.xlu0 %v650, 125
    %v671 = vpop.permute.xlu0 %670
    %672 = vrot.lane.b32.xlu0 %v651, 125
    %v673 = vpop.permute.xlu0 %672
    %674 = vrot.lane.b32.xlu0 %v652, 125
    %v675 = vpop.permute.xlu0 %674
    %676 = vrot.lane.b32.xlu0 %v653, 125
    %v677 = vpop.permute.xlu0 %676
    %v678 = vsel %vm297, %v663, %v665
    %v679 = vsel %vm297, %v667, %v669
    %v680 = vsel %vm297, %v671, %v673
    %v681 = vsel %vm297, %v675, %v677
    %686 = vst [vmem:[#allocation5 + $0x60] sm:$0xff] %v678
    %687 = vst [vmem:[#allocation5 + $0x68] sm:$0xff] %v679
    %688 = vst [vmem:[#allocation5 + $0x70] sm:$0xff] %v680
    %689 = vst [vmem:[#allocation5 + $0x78] sm:$0xff] %v681
    %v690 = vld [vmem:[#allocation3] sm:$0xff]
    %v691 = vld [vmem:[#allocation3 + $0x8] sm:$0xff]
    %v692 = vld [vmem:[#allocation3 + $0x10] sm:$0xff]
    %v693 = vld [vmem:[#allocation3 + $0x18] sm:$0xff]
    %v694 = vld [vmem:[#allocation3 + $0x20] sm:$0xff]
    %v695 = vld [vmem:[#allocation3 + $0x28] sm:$0xff]
    %v696 = vld [vmem:[#allocation3 + $0x30] sm:$0xff]
    %v697 = vld [vmem:[#allocation3 + $0x38] sm:$0xff]
    %706 = vrot.lane.b32.xlu0 %v690, 124
    %v707 = vpop.permute.xlu0 %706
    %708 = vrot.lane.b32.xlu0 %v691, 124
    %v709 = vpop.permute.xlu0 %708
    %710 = vrot.lane.b32.xlu0 %v692, 124
    %v711 = vpop.permute.xlu0 %710
    %712 = vrot.lane.b32.xlu0 %v693, 124
    %v713 = vpop.permute.xlu0 %712
    %714 = vrot.lane.b32.xlu0 %v694, 124
    %v715 = vpop.permute.xlu0 %714
    %716 = vrot.lane.b32.xlu0 %v695, 124
    %v717 = vpop.permute.xlu0 %716
    %718 = vrot.lane.b32.xlu0 %v696, 124
    %v719 = vpop.permute.xlu0 %718
    %720 = vrot.lane.b32.xlu0 %v697, 124
    %v721 = vpop.permute.xlu0 %720
    %v722 = vsel %vm358, %v707, %v709
    %v723 = vsel %vm358, %v711, %v713
    %v724 = vsel %vm358, %v715, %v717
    %v725 = vsel %vm358, %v719, %v721
    %730 = vst [vmem:[#allocation5 + $0x80] sm:$0xff] %v722
    %731 = vst [vmem:[#allocation5 + $0x88] sm:$0xff] %v723
    %732 = vst [vmem:[#allocation5 + $0x90] sm:$0xff] %v724
    %733 = vst [vmem:[#allocation5 + $0x98] sm:$0xff] %v725
    %v734 = vld [vmem:[#allocation3] sm:$0xff]
    %v735 = vld [vmem:[#allocation3 + $0x8] sm:$0xff]
    %v736 = vld [vmem:[#allocation3 + $0x10] sm:$0xff]
    %v737 = vld [vmem:[#allocation3 + $0x18] sm:$0xff]
    %v738 = vld [vmem:[#allocation3 + $0x20] sm:$0xff]
    %v739 = vld [vmem:[#allocation3 + $0x28] sm:$0xff]
    %v740 = vld [vmem:[#allocation3 + $0x30] sm:$0xff]
    %v741 = vld [vmem:[#allocation3 + $0x38] sm:$0xff]
    %750 = vrot.lane.b32.xlu0 %v734, 123
    %v751 = vpop.permute.xlu0 %750
    %752 = vrot.lane.b32.xlu0 %v735, 123
    %v753 = vpop.permute.xlu0 %752
    %754 = vrot.lane.b32.xlu0 %v736, 123
    %v755 = vpop.permute.xlu0 %754
    %756 = vrot.lane.b32.xlu0 %v737, 123
    %v757 = vpop.permute.xlu0 %756
    %758 = vrot.lane.b32.xlu0 %v738, 123
    %v759 = vpop.permute.xlu0 %758
    %760 = vrot.lane.b32.xlu0 %v739, 123
    %v761 = vpop.permute.xlu0 %760
    %762 = vrot.lane.b32.xlu0 %v740, 123
    %v763 = vpop.permute.xlu0 %762
    %764 = vrot.lane.b32.xlu0 %v741, 123
    %v765 = vpop.permute.xlu0 %764
    %v766 = vsel %vm419, %v751, %v753
    %v767 = vsel %vm419, %v755, %v757
    %v768 = vsel %vm419, %v759, %v761
    %v769 = vsel %vm419, %v763, %v765
    %774 = vst [vmem:[#allocation5 + $0xa0] sm:$0xff] %v766
    %775 = vst [vmem:[#allocation5 + $0xa8] sm:$0xff] %v767
    %776 = vst [vmem:[#allocation5 + $0xb0] sm:$0xff] %v768
    %777 = vst [vmem:[#allocation5 + $0xb8] sm:$0xff] %v769
    %v778 = vld [vmem:[#allocation3] sm:$0xff]
    %v779 = vld [vmem:[#allocation3 + $0x8] sm:$0xff]
    %v780 = vld [vmem:[#allocation3 + $0x10] sm:$0xff]
    %v781 = vld [vmem:[#allocation3 + $0x18] sm:$0xff]
    %v782 = vld [vmem:[#allocation3 + $0x20] sm:$0xff]
    %v783 = vld [vmem:[#allocation3 + $0x28] sm:$0xff]
    %v784 = vld [vmem:[#allocation3 + $0x30] sm:$0xff]
    %v785 = vld [vmem:[#allocation3 + $0x38] sm:$0xff]
    %794 = vrot.lane.b32.xlu0 %v778, 122
    %v795 = vpop.permute.xlu0 %794
    %796 = vrot.lane.b32.xlu0 %v779, 122
    %v797 = vpop.permute.xlu0 %796
    %798 = vrot.lane.b32.xlu0 %v780, 122
    %v799 = vpop.permute.xlu0 %798
    %800 = vrot.lane.b32.xlu0 %v781, 122
    %v801 = vpop.permute.xlu0 %800
    %802 = vrot.lane.b32.xlu0 %v782, 122
    %v803 = vpop.permute.xlu0 %802
    %804 = vrot.lane.b32.xlu0 %v783, 122
    %v805 = vpop.permute.xlu0 %804
    %806 = vrot.lane.b32.xlu0 %v784, 122
    %v807 = vpop.permute.xlu0 %806
    %808 = vrot.lane.b32.xlu0 %v785, 122
    %v809 = vpop.permute.xlu0 %808
    %v810 = vsel %vm480, %v795, %v797
    %v811 = vsel %vm480, %v799, %v801
    %v812 = vsel %vm480, %v803, %v805
    %v813 = vsel %vm480, %v807, %v809
    %818 = vst [vmem:[#allocation5 + $0xc0] sm:$0xff] %v810
    %819 = vst [vmem:[#allocation5 + $0xc8] sm:$0xff] %v811
    %820 = vst [vmem:[#allocation5 + $0xd0] sm:$0xff] %v812
    %821 = vst [vmem:[#allocation5 + $0xd8] sm:$0xff] %v813
    %v822 = vld [vmem:[%s2] sm:$0xff]
    %v823 = vld [vmem:[%s2 + $0x8] sm:$0xff]
    %v824 = vld [vmem:[%s2 + $0x10] sm:$0xff]
    %v825 = vld [vmem:[%s2 + $0x18] sm:$0xff]
    %v826 = vld [vmem:[%s2 + $0x20] sm:$0xff]
    %v827 = vld [vmem:[%s2 + $0x28] sm:$0xff]
    %v828 = vld [vmem:[%s2 + $0x30] sm:$0xff]
    %v829 = vld [vmem:[%s2 + $0x38] sm:$0xff]
    %v830 = vld [vmem:[#allocation5] sm:$0xff]
    %v831 = vld [vmem:[#allocation5 + $0x8] sm:$0xff]
    %v832 = vld [vmem:[#allocation5 + $0x10] sm:$0xff]
    %v833 = vld [vmem:[#allocation5 + $0x18] sm:$0xff]
    %v834 = vld [vmem:[#allocation5 + $0x20] sm:$0xff]
    %v835 = vld [vmem:[#allocation5 + $0x28] sm:$0xff]
    %v836 = vld [vmem:[#allocation5 + $0x30] sm:$0xff]
    %v837 = vld [vmem:[#allocation5 + $0x38] sm:$0xff]
    %v838 = vld [vmem:[#allocation5 + $0x40] sm:$0xff]
    %v839 = vld [vmem:[#allocation5 + $0x48] sm:$0xff]
    %v840 = vld [vmem:[#allocation5 + $0x50] sm:$0xff]
    %v841 = vld [vmem:[#allocation5 + $0x58] sm:$0xff]
    %v842 = vld [vmem:[#allocation5 + $0x60] sm:$0xff]
    %v843 = vld [vmem:[#allocation5 + $0x68] sm:$0xff]
    %v844 = vld [vmem:[#allocation5 + $0x70] sm:$0xff]
    %v845 = vld [vmem:[#allocation5 + $0x78] sm:$0xff]
    %v846 = vld [vmem:[#allocation5 + $0x80] sm:$0xff]
    %v847 = vld [vmem:[#allocation5 + $0x88] sm:$0xff]
    %v848 = vld [vmem:[#allocation5 + $0x90] sm:$0xff]
    %v849 = vld [vmem:[#allocation5 + $0x98] sm:$0xff]
    %v850 = vld [vmem:[#allocation5 + $0xa0] sm:$0xff]
    %v851 = vld [vmem:[#allocation5 + $0xa8] sm:$0xff]
    %v852 = vld [vmem:[#allocation5 + $0xb0] sm:$0xff]
    %v853 = vld [vmem:[#allocation5 + $0xb8] sm:$0xff]
    %v854 = vld [vmem:[#allocation5 + $0xc0] sm:$0xff]
    %v855 = vld [vmem:[#allocation5 + $0xc8] sm:$0xff]
    %v856 = vld [vmem:[#allocation5 + $0xd0] sm:$0xff]
    %v857 = vld [vmem:[#allocation5 + $0xd8] sm:$0xff]
    %v858 = vld [vmem:[#allocation5 + $0xe0] sm:$0xff]
    %v859 = vld [vmem:[#allocation5 + $0xe8] sm:$0xff]
    %v860 = vld [vmem:[#allocation5 + $0xf0] sm:$0xff]
    %v861 = vld [vmem:[#allocation5 + $0xf8] sm:$0xff]
    %v862 = vld [vmem:[%s4] sm:$0xff]
    %v863 = vld [vmem:[%s4 + $0x8] sm:$0xff]
    %v864 = vld [vmem:[%s4 + $0x10] sm:$0xff]
    %v865 = vld [vmem:[%s4 + $0x18] sm:$0xff]
    %867 = vset.pattern.permute.xlu0 1
    %868 = vperm.xlu0 %867, %v862
    %v869 = vpop.permute.xlu0 %868
    %872 = vset.pattern.permute.xlu0 1
    %873 = vperm.xlu0 %872, %v863
    %v874 = vpop.permute.xlu0 %873
    %877 = vset.pattern.permute.xlu0 1
    %878 = vperm.xlu0 %877, %v864
    %v879 = vpop.permute.xlu0 %878
    %882 = vset.pattern.permute.xlu0 1
    %883 = vperm.xlu0 %882, %v865
    %v884 = vpop.permute.xlu0 %883
    %886 = vmatprep.subr.mxu0 0.0
    %887 = vmatpush1.msra.mxu0 %v845
    %888 = vmatprep.subr.mxu0 0.0
    %889 = vmatpush1.msra.mxu0 %v844
    %890 = vmatprep.subr.mxu0 0.0
    %891 = vmatpush1.msra.mxu0 %v843
    %892 = vmatprep.subr.mxu0 0.0
    %893 = vmatpush1.msra.mxu0 %v842
    %894 = vmatprep.subr.mxu0 0.0
    %895 = vmatpush1.msra.mxu0 %v841
    %896 = vmatprep.subr.mxu0 0.0
    %897 = vmatpush1.msra.mxu0 %v840
    %898 = vmatprep.subr.mxu0 0.0
    %899 = vmatpush1.msra.mxu0 %v839
    %900 = vmatprep.subr.mxu0 0.0
    %901 = vmatpush1.msra.mxu0 %v838
    %902 = vmatprep.subr.mxu0 0.0
    %903 = vmatpush1.msra.mxu0 %v837
    %904 = vmatprep.subr.mxu0 0.0
    %905 = vmatpush1.msra.mxu0 %v836
    %906 = vmatprep.subr.mxu0 0.0
    %907 = vmatpush1.msra.mxu0 %v835
    %908 = vmatprep.subr.mxu0 0.0
    %909 = vmatpush1.msra.mxu0 %v834
    %910 = vmatprep.subr.mxu0 0.0
    %911 = vmatpush1.msra.mxu0 %v833
    %912 = vmatprep.subr.mxu0 0.0
    %913 = vmatpush1.msra.mxu0 %v832
    %914 = vmatprep.subr.mxu0 0.0
    %915 = vmatpush1.msra.mxu0 %v831
    %916 = vmatprep.subr.mxu0 0.0
    %917 = vmatpush1.msra.mxu0 %v830
    %918 = vmatprep.subr.mxu0 0.0
    %919 = vmatpush2.msra.mxu0 %v861
    %920 = vmatprep.subr.mxu0 0.0
    %921 = vmatpush2.msra.mxu0 %v860
    %922 = vmatprep.subr.mxu0 0.0
    %923 = vmatpush2.msra.mxu0 %v859
    %924 = vmatprep.subr.mxu0 0.0
    %925 = vmatpush2.msra.mxu0 %v858
    %926 = vmatprep.subr.mxu0 0.0
    %927 = vmatpush2.msra.mxu0 %v857
    %928 = vmatprep.subr.mxu0 0.0
    %929 = vmatpush2.msra.mxu0 %v856
    %930 = vmatprep.subr.mxu0 0.0
    %931 = vmatpush2.msra.mxu0 %v855
    %932 = vmatprep.subr.mxu0 0.0
    %933 = vmatpush2.msra.mxu0 %v854
    %934 = vmatprep.subr.mxu0 0.0
    %935 = vmatpush2.msra.mxu0 %v853
    %936 = vmatprep.subr.mxu0 0.0
    %937 = vmatpush2.msra.mxu0 %v852
    %938 = vmatprep.subr.mxu0 0.0
    %939 = vmatpush2.msra.mxu0 %v851
    %940 = vmatprep.subr.mxu0 0.0
    %941 = vmatpush2.msra.mxu0 %v850
    %942 = vmatprep.subr.mxu0 0.0
    %943 = vmatpush2.msra.mxu0 %v849
    %944 = vmatprep.subr.mxu0 0.0
    %945 = vmatpush2.msra.mxu0 %v848
    %946 = vmatprep.subr.mxu0 0.0
    %947 = vmatpush2.msra.mxu0 %v847
    %948 = vmatprep.subr.mxu0 0.0
    %949 = vmatpush2.msra.mxu0 %v846
    %950 = vmatprep.mubr.f32.mxu0 %v823
    %951 = vmatmul.mubr.f32.gmra.mxu0 %v822
    %v952 = vpop.f32.mrf.mxu0
    %v953 = vadd.f32 %v869, %v952
    %v954 = vpop.f32.mrf.mxu0
    %955 = vmatprep.mubr.f32.mxu0 %v825
    %956 = vmatmul.mubr.f32.gmra.mxu0 %v824
    %v957 = vpop.f32.mrf.mxu0
    %v958 = vadd.f32 %v874, %v957
    %v959 = vpop.f32.mrf.mxu0
    %960 = vmatprep.mubr.f32.mxu0 %v827
    %961 = vmatmul.mubr.f32.gmra.mxu0 %v826
    %v962 = vpop.f32.mrf.mxu0
    %v963 = vadd.f32 %v879, %v962
    %v964 = vpop.f32.mrf.mxu0
    %965 = vmatprep.mubr.f32.mxu0 %v829
    %966 = vmatmul.mubr.f32.gmra.mxu0 %v828
    %v967 = vpop.f32.mrf.mxu0
    %v968 = vadd.f32 %v884, %v967
    %v969 = vpop.f32.mrf.mxu0
    %970 = vdwg.mxu0
    %v971 = vmax.f32 %v953, 0.0
    %v972 = vmax.f32 %v958, 0.0
    %v973 = vmax.f32 %v963, 0.0
    %v974 = vmax.f32 %v968, 0.0
    %979 = vrot.lane.b32.xlu0 %v971, 3
    %v980 = vpop.permute.xlu0 %979
    %981 = vrot.lane.b32.xlu0 %v972, 3
    %v982 = vpop.permute.xlu0 %981
    %983 = vrot.lane.b32.xlu0 %v973, 3
    %v984 = vpop.permute.xlu0 %983
    %985 = vrot.lane.b32.xlu0 %v974, 3
    %v986 = vpop.permute.xlu0 %985
    %991 = vst.msk [vmem:[#allocation4] sm:$0xff] %vm541, %v980
    %992 = vst.msk [vmem:[#allocation4 + $0x8] sm:$0xff] %vm30, %v980
    %993 = vst.msk [vmem:[#allocation4 + $0x10] sm:$0xff] %vm541, %v982
    %994 = vst.msk [vmem:[#allocation4 + $0x18] sm:$0xff] %vm30, %v982
    %995 = vst.msk [vmem:[#allocation4 + $0x20] sm:$0xff] %vm541, %v984
    %996 = vst.msk [vmem:[#allocation4 + $0x28] sm:$0xff] %vm30, %v984
    %997 = vst.msk [vmem:[#allocation4 + $0x30] sm:$0xff] %vm541, %v986
    %998 = vst.msk [vmem:[#allocation4 + $0x38] sm:$0xff] %vm30, %v986
    %v999 = vld [vmem:[#allocation4] sm:$0xff]
    %v1000 = vld [vmem:[#allocation4 + $0x10] sm:$0xff]
    %v1001 = vld [vmem:[#allocation4 + $0x20] sm:$0xff]
    %v1002 = vld [vmem:[#allocation4 + $0x30] sm:$0xff]
    %1004 = vset.pattern.permute.xlu0 0
    %1005 = vperm.xlu0 %1004, %v56
    %v1006 = vpop.permute.xlu0 %1005
    %1009 = vset.pattern.permute.xlu0 0
    %1010 = vperm.xlu0 %1009, %v57
    %v1011 = vpop.permute.xlu0 %1010
    %1014 = vset.pattern.permute.xlu0 0
    %1015 = vperm.xlu0 %1014, %v58
    %v1016 = vpop.permute.xlu0 %1015
    %1019 = vset.pattern.permute.xlu0 0
    %1020 = vperm.xlu0 %1019, %v59
    %v1021 = vpop.permute.xlu0 %1020
    %v1023 = vmul.f32 %v1006, %v999
    %v1024 = vmul.f32 %v1011, %v1000
    %v1025 = vmul.f32 %v1016, %v1001
    %v1026 = vmul.f32 %v1021, %v1002
    %v1027 = vld [vmem:[#allocation4] sm:$0xff]
    %v1028 = vld [vmem:[#allocation4 + $0x8] sm:$0xff]
    %v1029 = vld [vmem:[#allocation4 + $0x10] sm:$0xff]
    %v1030 = vld [vmem:[#allocation4 + $0x18] sm:$0xff]
    %v1031 = vld [vmem:[#allocation4 + $0x20] sm:$0xff]
    %v1032 = vld [vmem:[#allocation4 + $0x28] sm:$0xff]
    %v1033 = vld [vmem:[#allocation4 + $0x30] sm:$0xff]
    %v1034 = vld [vmem:[#allocation4 + $0x38] sm:$0xff]
    %1035 = vset.pattern.permute.xlu0 1
    %1036 = vperm.xlu0 %1035, %v56
    %v1037 = vpop.permute.xlu0 %1036
    %1039 = vset.pattern.permute.xlu0 1
    %1040 = vperm.xlu0 %1039, %v57
    %v1041 = vpop.permute.xlu0 %1040
    %1043 = vset.pattern.permute.xlu0 1
    %1044 = vperm.xlu0 %1043, %v58
    %v1045 = vpop.permute.xlu0 %1044
    %1047 = vset.pattern.permute.xlu0 1
    %1048 = vperm.xlu0 %1047, %v59
    %v1049 = vpop.permute.xlu0 %1048
    %v1051 = vmul.f32 %v1037, %v1027
    %v1052 = vmul.f32 %v1037, %v1028
    %v1053 = vmul.f32 %v1041, %v1029
    %v1054 = vmul.f32 %v1041, %v1030
    %v1055 = vmul.f32 %v1045, %v1031
    %v1056 = vmul.f32 %v1045, %v1032
    %v1057 = vmul.f32 %v1049, %v1033
    %v1058 = vmul.f32 %v1049, %v1034
    %1067 = vrot.lane.b32.xlu0 %v1051, 127
    %v1068 = vpop.permute.xlu0 %1067
    %1069 = vrot.lane.b32.xlu0 %v1052, 127
    %v1070 = vpop.permute.xlu0 %1069
    %1071 = vrot.lane.b32.xlu0 %v1053, 127
    %v1072 = vpop.permute.xlu0 %1071
    %1073 = vrot.lane.b32.xlu0 %v1054, 127
    %v1074 = vpop.permute.xlu0 %1073
    %1075 = vrot.lane.b32.xlu0 %v1055, 127
    %v1076 = vpop.permute.xlu0 %1075
    %1077 = vrot.lane.b32.xlu0 %v1056, 127
    %v1078 = vpop.permute.xlu0 %1077
    %1079 = vrot.lane.b32.xlu0 %v1057, 127
    %v1080 = vpop.permute.xlu0 %1079
    %1081 = vrot.lane.b32.xlu0 %v1058, 127
    %v1082 = vpop.permute.xlu0 %1081
    %v1083 = vsel %vm175, %v1068, %v1070
    %v1084 = vsel %vm175, %v1072, %v1074
    %v1085 = vsel %vm175, %v1076, %v1078
    %v1086 = vsel %vm175, %v1080, %v1082
    %v1091 = vadd.f32 %v1023, %v1083
    %v1092 = vadd.f32 %v1024, %v1084
    %v1093 = vadd.f32 %v1025, %v1085
    %v1094 = vadd.f32 %v1026, %v1086
    %1095 = vset.pattern.permute.xlu0 2
    %1096 = vperm.xlu0 %1095, %v56
    %v1097 = vpop.permute.xlu0 %1096
    %1099 = vset.pattern.permute.xlu0 2
    %1100 = vperm.xlu0 %1099, %v57
    %v1101 = vpop.permute.xlu0 %1100
    %1103 = vset.pattern.permute.xlu0 2
    %1104 = vperm.xlu0 %1103, %v58
    %v1105 = vpop.permute.xlu0 %1104
    %1107 = vset.pattern.permute.xlu0 2
    %1108 = vperm.xlu0 %1107, %v59
    %v1109 = vpop.permute.xlu0 %1108
    %v1111 = vmul.f32 %v1097, %v1027
    %v1112 = vmul.f32 %v1097, %v1028
    %v1113 = vmul.f32 %v1101, %v1029
    %v1114 = vmul.f32 %v1101, %v1030
    %v1115 = vmul.f32 %v1105, %v1031
    %v1116 = vmul.f32 %v1105, %v1032
    %v1117 = vmul.f32 %v1109, %v1033
    %v1118 = vmul.f32 %v1109, %v1034
    %1127 = vrot.lane.b32.xlu0 %v1111, 126
    %v1128 = vpop.permute.xlu0 %1127
    %1129 = vrot.lane.b32.xlu0 %v1112, 126
    %v1130 = vpop.permute.xlu0 %1129
    %1131 = vrot.lane.b32.xlu0 %v1113, 126
    %v1132 = vpop.permute.xlu0 %1131
    %1133 = vrot.lane.b32.xlu0 %v1114, 126
    %v1134 = vpop.permute.xlu0 %1133
    %1135 = vrot.lane.b32.xlu0 %v1115, 126
    %v1136 = vpop.permute.xlu0 %1135
    %1137 = vrot.lane.b32.xlu0 %v1116, 126
    %v1138 = vpop.permute.xlu0 %1137
    %1139 = vrot.lane.b32.xlu0 %v1117, 126
    %v1140 = vpop.permute.xlu0 %1139
    %1141 = vrot.lane.b32.xlu0 %v1118, 126
    %v1142 = vpop.permute.xlu0 %1141
    %v1143 = vsel %vm236, %v1128, %v1130
    %v1144 = vsel %vm236, %v1132, %v1134
    %v1145 = vsel %vm236, %v1136, %v1138
    %v1146 = vsel %vm236, %v1140, %v1142
    %v1151 = vadd.f32 %v1091, %v1143
    %v1152 = vadd.f32 %v1092, %v1144
    %v1153 = vadd.f32 %v1093, %v1145
    %v1154 = vadd.f32 %v1094, %v1146
    %1155 = vset.pattern.permute.xlu0 3
    %1156 = vperm.xlu0 %1155, %v56
    %v1157 = vpop.permute.xlu0 %1156
    %1159 = vset.pattern.permute.xlu0 3
    %1160 = vperm.xlu0 %1159, %v57
    %v1161 = vpop.permute.xlu0 %1160
    %1163 = vset.pattern.permute.xlu0 3
    %1164 = vperm.xlu0 %1163, %v58
    %v1165 = vpop.permute.xlu0 %1164
    %1167 = vset.pattern.permute.xlu0 3
    %1168 = vperm.xlu0 %1167, %v59
    %v1169 = vpop.permute.xlu0 %1168
    %v1171 = vmul.f32 %v1157, %v1027
    %v1172 = vmul.f32 %v1157, %v1028
    %v1173 = vmul.f32 %v1161, %v1029
    %v1174 = vmul.f32 %v1161, %v1030
    %v1175 = vmul.f32 %v1165, %v1031
    %v1176 = vmul.f32 %v1165, %v1032
    %v1177 = vmul.f32 %v1169, %v1033
    %v1178 = vmul.f32 %v1169, %v1034
    %1187 = vrot.lane.b32.xlu0 %v1171, 125
    %v1188 = vpop.permute.xlu0 %1187
    %1189 = vrot.lane.b32.xlu0 %v1172, 125
    %v1190 = vpop.permute.xlu0 %1189
    %1191 = vrot.lane.b32.xlu0 %v1173, 125
    %v1192 = vpop.permute.xlu0 %1191
    %1193 = vrot.lane.b32.xlu0 %v1174, 125
    %v1194 = vpop.permute.xlu0 %1193
    %1195 = vrot.lane.b32.xlu0 %v1175, 125
    %v1196 = vpop.permute.xlu0 %1195
    %1197 = vrot.lane.b32.xlu0 %v1176, 125
    %v1198 = vpop.permute.xlu0 %1197
    %1199 = vrot.lane.b32.xlu0 %v1177, 125
    %v1200 = vpop.permute.xlu0 %1199
    %1201 = vrot.lane.b32.xlu0 %v1178, 125
    %v1202 = vpop.permute.xlu0 %1201
    %v1203 = vsel %vm297, %v1188, %v1190
    %v1204 = vsel %vm297, %v1192, %v1194
    %v1205 = vsel %vm297, %v1196, %v1198
    %v1206 = vsel %vm297, %v1200, %v1202
    %v1211 = vadd.f32 %v1151, %v1203
    %v1212 = vadd.f32 %v1152, %v1204
    %v1213 = vadd.f32 %v1153, %v1205
    %v1214 = vadd.f32 %v1154, %v1206
    %1215 = vset.pattern.permute.xlu0 4
    %1216 = vperm.xlu0 %1215, %v56
    %v1217 = vpop.permute.xlu0 %1216
    %1219 = vset.pattern.permute.xlu0 4
    %1220 = vperm.xlu0 %1219, %v57
    %v1221 = vpop.permute.xlu0 %1220
    %1223 = vset.pattern.permute.xlu0 4
    %1224 = vperm.xlu0 %1223, %v58
    %v1225 = vpop.permute.xlu0 %1224
    %1227 = vset.pattern.permute.xlu0 4
    %1228 = vperm.xlu0 %1227, %v59
    %v1229 = vpop.permute.xlu0 %1228
    %v1231 = vmul.f32 %v1217, %v1027
    %v1232 = vmul.f32 %v1217, %v1028
    %v1233 = vmul.f32 %v1221, %v1029
    %v1234 = vmul.f32 %v1221, %v1030
    %v1235 = vmul.f32 %v1225, %v1031
    %v1236 = vmul.f32 %v1225, %v1032
    %v1237 = vmul.f32 %v1229, %v1033
    %v1238 = vmul.f32 %v1229, %v1034
    %1247 = vrot.lane.b32.xlu0 %v1231, 124
    %v1248 = vpop.permute.xlu0 %1247
    %1249 = vrot.lane.b32.xlu0 %v1232, 124
    %v1250 = vpop.permute.xlu0 %1249
    %1251 = vrot.lane.b32.xlu0 %v1233, 124
    %v1252 = vpop.permute.xlu0 %1251
    %1253 = vrot.lane.b32.xlu0 %v1234, 124
    %v1254 = vpop.permute.xlu0 %1253
    %1255 = vrot.lane.b32.xlu0 %v1235, 124
    %v1256 = vpop.permute.xlu0 %1255
    %1257 = vrot.lane.b32.xlu0 %v1236, 124
    %v1258 = vpop.permute.xlu0 %1257
    %1259 = vrot.lane.b32.xlu0 %v1237, 124
    %v1260 = vpop.permute.xlu0 %1259
    %1261 = vrot.lane.b32.xlu0 %v1238, 124
    %v1262 = vpop.permute.xlu0 %1261
    %v1263 = vsel %vm358, %v1248, %v1250
    %v1264 = vsel %vm358, %v1252, %v1254
    %v1265 = vsel %vm358, %v1256, %v1258
    %v1266 = vsel %vm358, %v1260, %v1262
    %v1271 = vadd.f32 %v1211, %v1263
    %v1272 = vadd.f32 %v1212, %v1264
    %v1273 = vadd.f32 %v1213, %v1265
    %v1274 = vadd.f32 %v1214, %v1266
    %1275 = vset.pattern.permute.xlu0 5
    %1276 = vperm.xlu0 %1275, %v56
    %v1277 = vpop.permute.xlu0 %1276
    %1279 = vset.pattern.permute.xlu0 5
    %1280 = vperm.xlu0 %1279, %v57
    %v1281 = vpop.permute.xlu0 %1280
    %1283 = vset.pattern.permute.xlu0 5
    %1284 = vperm.xlu0 %1283, %v58
    %v1285 = vpop.permute.xlu0 %1284
    %1287 = vset.pattern.permute.xlu0 5
    %1288 = vperm.xlu0 %1287, %v59
    %v1289 = vpop.permute.xlu0 %1288
    %v1291 = vmul.f32 %v1277, %v1027
    %v1292 = vmul.f32 %v1277, %v1028
    %v1293 = vmul.f32 %v1281, %v1029
    %v1294 = vmul.f32 %v1281, %v1030
    %v1295 = vmul.f32 %v1285, %v1031
    %v1296 = vmul.f32 %v1285, %v1032
    %v1297 = vmul.f32 %v1289, %v1033
    %v1298 = vmul.f32 %v1289, %v1034
    %1307 = vrot.lane.b32.xlu0 %v1291, 123
    %v1308 = vpop.permute.xlu0 %1307
    %1309 = vrot.lane.b32.xlu0 %v1292, 123
    %v1310 = vpop.permute.xlu0 %1309
    %1311 = vrot.lane.b32.xlu0 %v1293, 123
    %v1312 = vpop.permute.xlu0 %1311
    %1313 = vrot.lane.b32.xlu0 %v1294, 123
    %v1314 = vpop.permute.xlu0 %1313
    %1315 = vrot.lane.b32.xlu0 %v1295, 123
    %v1316 = vpop.permute.xlu0 %1315
    %1317 = vrot.lane.b32.xlu0 %v1296, 123
    %v1318 = vpop.permute.xlu0 %1317
    %1319 = vrot.lane.b32.xlu0 %v1297, 123
    %v1320 = vpop.permute.xlu0 %1319
    %1321 = vrot.lane.b32.xlu0 %v1298, 123
    %v1322 = vpop.permute.xlu0 %1321
    %v1323 = vsel %vm419, %v1308, %v1310
    %v1324 = vsel %vm419, %v1312, %v1314
    %v1325 = vsel %vm419, %v1316, %v1318
    %v1326 = vsel %vm419, %v1320, %v1322
    %v1331 = vadd.f32 %v1271, %v1323
    %v1332 = vadd.f32 %v1272, %v1324
    %v1333 = vadd.f32 %v1273, %v1325
    %v1334 = vadd.f32 %v1274, %v1326
    %1335 = vset.pattern.permute.xlu0 6
    %1336 = vperm.xlu0 %1335, %v56
    %v1337 = vpop.permute.xlu0 %1336
    %1339 = vset.pattern.permute.xlu0 6
    %1340 = vperm.xlu0 %1339, %v57
    %v1341 = vpop.permute.xlu0 %1340
    %1343 = vset.pattern.permute.xlu0 6
    %1344 = vperm.xlu0 %1343, %v58
    %v1345 = vpop.permute.xlu0 %1344
    %1347 = vset.pattern.permute.xlu0 6
    %1348 = vperm.xlu0 %1347, %v59
    %v1349 = vpop.permute.xlu0 %1348
    %v1351 = vmul.f32 %v1337, %v1027
    %v1352 = vmul.f32 %v1337, %v1028
    %v1353 = vmul.f32 %v1341, %v1029
    %v1354 = vmul.f32 %v1341, %v1030
    %v1355 = vmul.f32 %v1345, %v1031
    %v1356 = vmul.f32 %v1345, %v1032
    %v1357 = vmul.f32 %v1349, %v1033
    %v1358 = vmul.f32 %v1349, %v1034
    %1367 = vrot.lane.b32.xlu0 %v1351, 122
    %v1368 = vpop.permute.xlu0 %1367
    %1369 = vrot.lane.b32.xlu0 %v1352, 122
    %v1370 = vpop.permute.xlu0 %1369
    %1371 = vrot.lane.b32.xlu0 %v1353, 122
    %v1372 = vpop.permute.xlu0 %1371
    %1373 = vrot.lane.b32.xlu0 %v1354, 122
    %v1374 = vpop.permute.xlu0 %1373
    %1375 = vrot.lane.b32.xlu0 %v1355, 122
    %v1376 = vpop.permute.xlu0 %1375
    %1377 = vrot.lane.b32.xlu0 %v1356, 122
    %v1378 = vpop.permute.xlu0 %1377
    %1379 = vrot.lane.b32.xlu0 %v1357, 122
    %v1380 = vpop.permute.xlu0 %1379
    %1381 = vrot.lane.b32.xlu0 %v1358, 122
    %v1382 = vpop.permute.xlu0 %1381
    %v1383 = vsel %vm480, %v1368, %v1370
    %v1384 = vsel %vm480, %v1372, %v1374
    %v1385 = vsel %vm480, %v1376, %v1378
    %v1386 = vsel %vm480, %v1380, %v1382
    %v1391 = vadd.f32 %v1331, %v1383
    %v1392 = vadd.f32 %v1332, %v1384
    %v1393 = vadd.f32 %v1333, %v1385
    %v1394 = vadd.f32 %v1334, %v1386
    %v1395 = vadd.f32 %v1391, %v1392
    %v1396 = vadd.f32 %v1395, %v1393
    %v1397 = vadd.f32 %v1396, %v1394
    %v1398 = vrot.slane %v1397, 4
    %v1399 = vadd.f32 %v1397, %v1398
    %v1400 = vrot.slane %v1399, 2
    %v1401 = vadd.f32 %v1399, %v1400
    %v1402 = vrot.slane %v1401, 1
    %v1403 = vadd.f32 %v1401, %v1402
    %v1404 = vld [vmem:[%s4] sm:$0x1]
    %1406 = vset.pattern.permute.xlu0 2
    %1407 = vperm.xlu0 %1406, %v1404
    %v1408 = vpop.permute.xlu0 %1407
    %v1410 = vadd.f32 %v1403, %v1408
    %1411 = vst [vmem:[#allocation6] sm:$0x1] %v1410
    %v1412 = vld [vmem:[%s0 + $0x1] sm:$0x1]
    %v1415 = vunpack.c.l.s4 1966171168
    %v1416 = vunpack.c.0.s8 %v1415
    %v1417 = vlaneseq
    %v1418 = vshrl.u32 %v1417, 7
    %v1419 = vsub.s32 %v1416, %v1418
    %v1420 = vrot.slane %v1412, %v1419
    %v1422 = vunpack.c.l.s4 1966171168
    %v1423 = vunpack.c.0.s8 %v1422
    %v1424 = vlaneseq
    %v1425 = vshrl.u32 %v1424, 7
    %v1426 = vsub.s32 %v1423, %v1425
    %v1427 = vrot.slane %v1420, %v1426
    %1428 = vrot.lane.b32.xlu0 %v1427, 3
    %v1429 = vpop.permute.xlu0 %1428
    %v1430 = vrot.slane %v1429, 7
    %v1431 = vsel %vm30, %v1430, %v1429
    %1433 = vst.msk [vmem:[#allocation2] sm:$0x3] %vm82, %v1431
    %v1434 = vld [vmem:[#allocation2] sm:$0x1]
    %v1436 = vlaneseq
    %v1437 = vshrl.u32 %v1436, 7
    %v1438 = vsub.s32 0, %v1437
    %v1439 = vrot.slane %v1434, %v1438
    %v1441 = vmul.f32 %v88, %v1439
    %v1442 = vmul.f32 %v93, %v1439
    %v1443 = vmul.f32 %v98, %v1439
    %v1444 = vmul.f32 %v103, %v1439
    %v1445 = vld [vmem:[#allocation2] sm:$0x3]
    %v1447 = vlaneseq
    %v1448 = vshrl.u32 %v1447, 7
    %v1449 = vsub.s32 0, %v1448
    %v1450 = vrot.slane %v1445, %v1449
    %v1451 = vlaneseq
    %v1452 = vshrl.u32 %v1451, 7
    %v1453 = vsub.s32 1, %v1452
    %v1454 = vrot.slane %v1445, %v1453
    %v1457 = vmul.f32 %v118, %v1450
    %v1458 = vmul.f32 %v118, %v1454
    %v1459 = vmul.f32 %v122, %v1450
    %v1460 = vmul.f32 %v122, %v1454
    %v1461 = vmul.f32 %v126, %v1450
    %v1462 = vmul.f32 %v126, %v1454
    %v1463 = vmul.f32 %v130, %v1450
    %v1464 = vmul.f32 %v130, %v1454
    %1473 = vrot.lane.b32.xlu0 %v1457, 127
    %v1474 = vpop.permute.xlu0 %1473
    %1475 = vrot.lane.b32.xlu0 %v1458, 127
    %v1476 = vpop.permute.xlu0 %1475
    %1477 = vrot.lane.b32.xlu0 %v1459, 127
    %v1478 = vpop.permute.xlu0 %1477
    %1479 = vrot.lane.b32.xlu0 %v1460, 127
    %v1480 = vpop.permute.xlu0 %1479
    %1481 = vrot.lane.b32.xlu0 %v1461, 127
    %v1482 = vpop.permute.xlu0 %1481
    %1483 = vrot.lane.b32.xlu0 %v1462, 127
    %v1484 = vpop.permute.xlu0 %1483
    %1485 = vrot.lane.b32.xlu0 %v1463, 127
    %v1486 = vpop.permute.xlu0 %1485
    %1487 = vrot.lane.b32.xlu0 %v1464, 127
    %v1488 = vpop.permute.xlu0 %1487
    %v1489 = vsel %vm175, %v1474, %v1476
    %v1490 = vsel %vm175, %v1478, %v1480
    %v1491 = vsel %vm175, %v1482, %v1484
    %v1492 = vsel %vm175, %v1486, %v1488
    %v1497 = vadd.f32 %v1441, %v1489
    %v1498 = vadd.f32 %v1442, %v1490
    %v1499 = vadd.f32 %v1443, %v1491
    %v1500 = vadd.f32 %v1444, %v1492
    %v1501 = vmul.f32 %v190, %v1450
    %v1502 = vmul.f32 %v190, %v1454
    %v1503 = vmul.f32 %v194, %v1450
    %v1504 = vmul.f32 %v194, %v1454
    %v1505 = vmul.f32 %v198, %v1450
    %v1506 = vmul.f32 %v198, %v1454
    %v1507 = vmul.f32 %v202, %v1450
    %v1508 = vmul.f32 %v202, %v1454
    %1517 = vrot.lane.b32.xlu0 %v1501, 126
    %v1518 = vpop.permute.xlu0 %1517
    %1519 = vrot.lane.b32.xlu0 %v1502, 126
    %v1520 = vpop.permute.xlu0 %1519
    %1521 = vrot.lane.b32.xlu0 %v1503, 126
    %v1522 = vpop.permute.xlu0 %1521
    %1523 = vrot.lane.b32.xlu0 %v1504, 126
    %v1524 = vpop.permute.xlu0 %1523
    %1525 = vrot.lane.b32.xlu0 %v1505, 126
    %v1526 = vpop.permute.xlu0 %1525
    %1527 = vrot.lane.b32.xlu0 %v1506, 126
    %v1528 = vpop.permute.xlu0 %1527
    %1529 = vrot.lane.b32.xlu0 %v1507, 126
    %v1530 = vpop.permute.xlu0 %1529
    %1531 = vrot.lane.b32.xlu0 %v1508, 126
    %v1532 = vpop.permute.xlu0 %1531
    %v1533 = vsel %vm236, %v1518, %v1520
    %v1534 = vsel %vm236, %v1522, %v1524
    %v1535 = vsel %vm236, %v1526, %v1528
    %v1536 = vsel %vm236, %v1530, %v1532
    %v1541 = vadd.f32 %v1497, %v1533
    %v1542 = vadd.f32 %v1498, %v1534
    %v1543 = vadd.f32 %v1499, %v1535
    %v1544 = vadd.f32 %v1500, %v1536
    %v1545 = vmul.f32 %v251, %v1450
    %v1546 = vmul.f32 %v251, %v1454
    %v1547 = vmul.f32 %v255, %v1450
    %v1548 = vmul.f32 %v255, %v1454
    %v1549 = vmul.f32 %v259, %v1450
    %v1550 = vmul.f32 %v259, %v1454
    %v1551 = vmul.f32 %v263, %v1450
    %v1552 = vmul.f32 %v263, %v1454
    %1561 = vrot.lane.b32.xlu0 %v1545, 125
    %v1562 = vpop.permute.xlu0 %1561
    %1563 = vrot.lane.b32.xlu0 %v1546, 125
    %v1564 = vpop.permute.xlu0 %1563
    %1565 = vrot.lane.b32.xlu0 %v1547, 125
    %v1566 = vpop.permute.xlu0 %1565
    %1567 = vrot.lane.b32.xlu0 %v1548, 125
    %v1568 = vpop.permute.xlu0 %1567
    %1569 = vrot.lane.b32.xlu0 %v1549, 125
    %v1570 = vpop.permute.xlu0 %1569
    %1571 = vrot.lane.b32.xlu0 %v1550, 125
    %v1572 = vpop.permute.xlu0 %1571
    %1573 = vrot.lane.b32.xlu0 %v1551, 125
    %v1574 = vpop.permute.xlu0 %1573
    %1575 = vrot.lane.b32.xlu0 %v1552, 125
    %v1576 = vpop.permute.xlu0 %1575
    %v1577 = vsel %vm297, %v1562, %v1564
    %v1578 = vsel %vm297, %v1566, %v1568
    %v1579 = vsel %vm297, %v1570, %v1572
    %v1580 = vsel %vm297, %v1574, %v1576
    %v1585 = vadd.f32 %v1541, %v1577
    %v1586 = vadd.f32 %v1542, %v1578
    %v1587 = vadd.f32 %v1543, %v1579
    %v1588 = vadd.f32 %v1544, %v1580
    %v1589 = vmul.f32 %v312, %v1450
    %v1590 = vmul.f32 %v312, %v1454
    %v1591 = vmul.f32 %v316, %v1450
    %v1592 = vmul.f32 %v316, %v1454
    %v1593 = vmul.f32 %v320, %v1450
    %v1594 = vmul.f32 %v320, %v1454
    %v1595 = vmul.f32 %v324, %v1450
    %v1596 = vmul.f32 %v324, %v1454
    %1605 = vrot.lane.b32.xlu0 %v1589, 124
    %v1606 = vpop.permute.xlu0 %1605
    %1607 = vrot.lane.b32.xlu0 %v1590, 124
    %v1608 = vpop.permute.xlu0 %1607
    %1609 = vrot.lane.b32.xlu0 %v1591, 124
    %v1610 = vpop.permute.xlu0 %1609
    %1611 = vrot.lane.b32.xlu0 %v1592, 124
    %v1612 = vpop.permute.xlu0 %1611
    %1613 = vrot.lane.b32.xlu0 %v1593, 124
    %v1614 = vpop.permute.xlu0 %1613
    %1615 = vrot.lane.b32.xlu0 %v1594, 124
    %v1616 = vpop.permute.xlu0 %1615
    %1617 = vrot.lane.b32.xlu0 %v1595, 124
    %v1618 = vpop.permute.xlu0 %1617
    %1619 = vrot.lane.b32.xlu0 %v1596, 124
    %v1620 = vpop.permute.xlu0 %1619
    %v1621 = vsel %vm358, %v1606, %v1608
    %v1622 = vsel %vm358, %v1610, %v1612
    %v1623 = vsel %vm358, %v1614, %v1616
    %v1624 = vsel %vm358, %v1618, %v1620
    %v1629 = vadd.f32 %v1585, %v1621
    %v1630 = vadd.f32 %v1586, %v1622
    %v1631 = vadd.f32 %v1587, %v1623
    %v1632 = vadd.f32 %v1588, %v1624
    %v1633 = vmul.f32 %v373, %v1450
    %v1634 = vmul.f32 %v373, %v1454
    %v1635 = vmul.f32 %v377, %v1450
    %v1636 = vmul.f32 %v377, %v1454
    %v1637 = vmul.f32 %v381, %v1450
    %v1638 = vmul.f32 %v381, %v1454
    %v1639 = vmul.f32 %v385, %v1450
    %v1640 = vmul.f32 %v385, %v1454
    %1649 = vrot.lane.b32.xlu0 %v1633, 123
    %v1650 = vpop.permute.xlu0 %1649
    %1651 = vrot.lane.b32.xlu0 %v1634, 123
    %v1652 = vpop.permute.xlu0 %1651
    %1653 = vrot.lane.b32.xlu0 %v1635, 123
    %v1654 = vpop.permute.xlu0 %1653
    %1655 = vrot.lane.b32.xlu0 %v1636, 123
    %v1656 = vpop.permute.xlu0 %1655
    %1657 = vrot.lane.b32.xlu0 %v1637, 123
    %v1658 = vpop.permute.xlu0 %1657
    %1659 = vrot.lane.b32.xlu0 %v1638, 123
    %v1660 = vpop.permute.xlu0 %1659
    %1661 = vrot.lane.b32.xlu0 %v1639, 123
    %v1662 = vpop.permute.xlu0 %1661
    %1663 = vrot.lane.b32.xlu0 %v1640, 123
    %v1664 = vpop.permute.xlu0 %1663
    %v1665 = vsel %vm419, %v1650, %v1652
    %v1666 = vsel %vm419, %v1654, %v1656
    %v1667 = vsel %vm419, %v1658, %v1660
    %v1668 = vsel %vm419, %v1662, %v1664
    %v1673 = vadd.f32 %v1629, %v1665
    %v1674 = vadd.f32 %v1630, %v1666
    %v1675 = vadd.f32 %v1631, %v1667
    %v1676 = vadd.f32 %v1632, %v1668
    %v1677 = vmul.f32 %v434, %v1450
    %v1678 = vmul.f32 %v434, %v1454
    %v1679 = vmul.f32 %v438, %v1450
    %v1680 = vmul.f32 %v438, %v1454
    %v1681 = vmul.f32 %v442, %v1450
    %v1682 = vmul.f32 %v442, %v1454
    %v1683 = vmul.f32 %v446, %v1450
    %v1684 = vmul.f32 %v446, %v1454
    %1693 = vrot.lane.b32.xlu0 %v1677, 122
    %v1694 = vpop.permute.xlu0 %1693
    %1695 = vrot.lane.b32.xlu0 %v1678, 122
    %v1696 = vpop.permute.xlu0 %1695
    %1697 = vrot.lane.b32.xlu0 %v1679, 122
    %v1698 = vpop.permute.xlu0 %1697
    %1699 = vrot.lane.b32.xlu0 %v1680, 122
    %v1700 = vpop.permute.xlu0 %1699
    %1701 = vrot.lane.b32.xlu0 %v1681, 122
    %v1702 = vpop.permute.xlu0 %1701
    %1703 = vrot.lane.b32.xlu0 %v1682, 122
    %v1704 = vpop.permute.xlu0 %1703
    %1705 = vrot.lane.b32.xlu0 %v1683, 122
    %v1706 = vpop.permute.xlu0 %1705
    %1707 = vrot.lane.b32.xlu0 %v1684, 122
    %v1708 = vpop.permute.xlu0 %1707
    %v1709 = vsel %vm480, %v1694, %v1696
    %v1710 = vsel %vm480, %v1698, %v1700
    %v1711 = vsel %vm480, %v1702, %v1704
    %v1712 = vsel %vm480, %v1706, %v1708
    %v1717 = vadd.f32 %v1673, %v1709
    %v1718 = vadd.f32 %v1674, %v1710
    %v1719 = vadd.f32 %v1675, %v1711
    %v1720 = vadd.f32 %v1676, %v1712
    %v1721 = vld [vmem:[%s4] sm:$0xff]
    %v1722 = vld [vmem:[%s4 + $0x8] sm:$0xff]
    %v1723 = vld [vmem:[%s4 + $0x10] sm:$0xff]
    %v1724 = vld [vmem:[%s4 + $0x18] sm:$0xff]
    %1726 = vset.pattern.permute.xlu0 0
    %1727 = vperm.xlu0 %1726, %v1721
    %v1728 = vpop.permute.xlu0 %1727
    %1731 = vset.pattern.permute.xlu0 0
    %1732 = vperm.xlu0 %1731, %v1722
    %v1733 = vpop.permute.xlu0 %1732
    %1736 = vset.pattern.permute.xlu0 0
    %1737 = vperm.xlu0 %1736, %v1723
    %v1738 = vpop.permute.xlu0 %1737
    %1741 = vset.pattern.permute.xlu0 0
    %1742 = vperm.xlu0 %1741, %v1724
    %v1743 = vpop.permute.xlu0 %1742
    %v1745 = vadd.f32 %v1717, %v1728
    %v1746 = vadd.f32 %v1718, %v1733
    %v1747 = vadd.f32 %v1719, %v1738
    %v1748 = vadd.f32 %v1720, %v1743
    %v1749 = vmax.f32 %v1745, 0.0
    %v1750 = vmax.f32 %v1746, 0.0
    %v1751 = vmax.f32 %v1747, 0.0
    %v1752 = vmax.f32 %v1748, 0.0
    %1757 = vrot.lane.b32.xlu0 %v1749, 3
    %v1758 = vpop.permute.xlu0 %1757
    %1759 = vrot.lane.b32.xlu0 %v1750, 3
    %v1760 = vpop.permute.xlu0 %1759
    %1761 = vrot.lane.b32.xlu0 %v1751, 3
    %v1762 = vpop.permute.xlu0 %1761
    %1763 = vrot.lane.b32.xlu0 %v1752, 3
    %v1764 = vpop.permute.xlu0 %1763
    %1769 = vst.msk [vmem:[#allocation3] sm:$0xff] %vm541, %v1758
    %1770 = vst.msk [vmem:[#allocation3 + $0x8] sm:$0xff] %vm30, %v1758
    %1771 = vst.msk [vmem:[#allocation3 + $0x10] sm:$0xff] %vm541, %v1760
    %1772 = vst.msk [vmem:[#allocation3 + $0x18] sm:$0xff] %vm30, %v1760
    %1773 = vst.msk [vmem:[#allocation3 + $0x20] sm:$0xff] %vm541, %v1762
    %1774 = vst.msk [vmem:[#allocation3 + $0x28] sm:$0xff] %vm30, %v1762
    %1775 = vst.msk [vmem:[#allocation3 + $0x30] sm:$0xff] %vm541, %v1764
    %1776 = vst.msk [vmem:[#allocation3 + $0x38] sm:$0xff] %vm30, %v1764
    %v1777 = vld [vmem:[#allocation3] sm:$0xff]
    %v1778 = vld [vmem:[#allocation3 + $0x10] sm:$0xff]
    %v1779 = vld [vmem:[#allocation3 + $0x20] sm:$0xff]
    %v1780 = vld [vmem:[#allocation3 + $0x30] sm:$0xff]
    %1781 = vst [vmem:[#allocation5] sm:$0xff] %v1777
    %1782 = vst [vmem:[#allocation5 + $0x8] sm:$0xff] %v1778
    %1783 = vst [vmem:[#allocation5 + $0x10] sm:$0xff] %v1779
    %1784 = vst [vmem:[#allocation5 + $0x18] sm:$0xff] %v1780
    %v1785 = vld [vmem:[#allocation3] sm:$0xff]
    %v1786 = vld [vmem:[#allocation3 + $0x8] sm:$0xff]
    %v1787 = vld [vmem:[#allocation3 + $0x10] sm:$0xff]
    %v1788 = vld [vmem:[#allocation3 + $0x18] sm:$0xff]
    %v1789 = vld [vmem:[#allocation3 + $0x20] sm:$0xff]
    %v1790 = vld [vmem:[#allocation3 + $0x28] sm:$0xff]
    %v1791 = vld [vmem:[#allocation3 + $0x30] sm:$0xff]
    %v1792 = vld [vmem:[#allocation3 + $0x38] sm:$0xff]
    %1801 = vrot.lane.b32.xlu0 %v1785, 127
    %v1802 = vpop.permute.xlu0 %1801
    %1803 = vrot.lane.b32.xlu0 %v1786, 127
    %v1804 = vpop.permute.xlu0 %1803
    %1805 = vrot.lane.b32.xlu0 %v1787, 127
    %v1806 = vpop.permute.xlu0 %1805
    %1807 = vrot.lane.b32.xlu0 %v1788, 127
    %v1808 = vpop.permute.xlu0 %1807
    %1809 = vrot.lane.b32.xlu0 %v1789, 127
    %v1810 = vpop.permute.xlu0 %1809
    %1811 = vrot.lane.b32.xlu0 %v1790, 127
    %v1812 = vpop.permute.xlu0 %1811
    %1813 = vrot.lane.b32.xlu0 %v1791, 127
    %v1814 = vpop.permute.xlu0 %1813
    %1815 = vrot.lane.b32.xlu0 %v1792, 127
    %v1816 = vpop.permute.xlu0 %1815
    %v1817 = vsel %vm175, %v1802, %v1804
    %v1818 = vsel %vm175, %v1806, %v1808
    %v1819 = vsel %vm175, %v1810, %v1812
    %v1820 = vsel %vm175, %v1814, %v1816
    %1825 = vst [vmem:[#allocation5 + $0x20] sm:$0xff] %v1817
    %1826 = vst [vmem:[#allocation5 + $0x28] sm:$0xff] %v1818
    %1827 = vst [vmem:[#allocation5 + $0x30] sm:$0xff] %v1819
    %1828 = vst [vmem:[#allocation5 + $0x38] sm:$0xff] %v1820
    %v1829 = vld [vmem:[#allocation3] sm:$0xff]
    %v1830 = vld [vmem:[#allocation3 + $0x8] sm:$0xff]
    %v1831 = vld [vmem:[#allocation3 + $0x10] sm:$0xff]
    %v1832 = vld [vmem:[#allocation3 + $0x18] sm:$0xff]
    %v1833 = vld [vmem:[#allocation3 + $0x20] sm:$0xff]
    %v1834 = vld [vmem:[#allocation3 + $0x28] sm:$0xff]
    %v1835 = vld [vmem:[#allocation3 + $0x30] sm:$0xff]
    %v1836 = vld [vmem:[#allocation3 + $0x38] sm:$0xff]
    %1845 = vrot.lane.b32.xlu0 %v1829, 126
    %v1846 = vpop.permute.xlu0 %1845
    %1847 = vrot.lane.b32.xlu0 %v1830, 126
    %v1848 = vpop.permute.xlu0 %1847
    %1849 = vrot.lane.b32.xlu0 %v1831, 126
    %v1850 = vpop.permute.xlu0 %1849
    %1851 = vrot.lane.b32.xlu0 %v1832, 126
    %v1852 = vpop.permute.xlu0 %1851
    %1853 = vrot.lane.b32.xlu0 %v1833, 126
    %v1854 = vpop.permute.xlu0 %1853
    %1855 = vrot.lane.b32.xlu0 %v1834, 126
    %v1856 = vpop.permute.xlu0 %1855
    %1857 = vrot.lane.b32.xlu0 %v1835, 126
    %v1858 = vpop.permute.xlu0 %1857
    %1859 = vrot.lane.b32.xlu0 %v1836, 126
    %v1860 = vpop.permute.xlu0 %1859
    %v1861 = vsel %vm236, %v1846, %v1848
    %v1862 = vsel %vm236, %v1850, %v1852
    %v1863 = vsel %vm236, %v1854, %v1856
    %v1864 = vsel %vm236, %v1858, %v1860
    %1869 = vst [vmem:[#allocation5 + $0x40] sm:$0xff] %v1861
    %1870 = vst [vmem:[#allocation5 + $0x48] sm:$0xff] %v1862
    %1871 = vst [vmem:[#allocation5 + $0x50] sm:$0xff] %v1863
    %1872 = vst [vmem:[#allocation5 + $0x58] sm:$0xff] %v1864
    %v1873 = vld [vmem:[#allocation3] sm:$0xff]
    %v1874 = vld [vmem:[#allocation3 + $0x8] sm:$0xff]
    %v1875 = vld [vmem:[#allocation3 + $0x10] sm:$0xff]
    %v1876 = vld [vmem:[#allocation3 + $0x18] sm:$0xff]
    %v1877 = vld [vmem:[#allocation3 + $0x20] sm:$0xff]
    %v1878 = vld [vmem:[#allocation3 + $0x28] sm:$0xff]
    %v1879 = vld [vmem:[#allocation3 + $0x30] sm:$0xff]
    %v1880 = vld [vmem:[#allocation3 + $0x38] sm:$0xff]
    %1889 = vrot.lane.b32.xlu0 %v1873, 125
    %v1890 = vpop.permute.xlu0 %1889
    %1891 = vrot.lane.b32.xlu0 %v1874, 125
    %v1892 = vpop.permute.xlu0 %1891
    %1893 = vrot.lane.b32.xlu0 %v1875, 125
    %v1894 = vpop.permute.xlu0 %1893
    %1895 = vrot.lane.b32.xlu0 %v1876, 125
    %v1896 = vpop.permute.xlu0 %1895
    %1897 = vrot.lane.b32.xlu0 %v1877, 125
    %v1898 = vpop.permute.xlu0 %1897
    %1899 = vrot.lane.b32.xlu0 %v1878, 125
    %v1900 = vpop.permute.xlu0 %1899
    %1901 = vrot.lane.b32.xlu0 %v1879, 125
    %v1902 = vpop.permute.xlu0 %1901
    %1903 = vrot.lane.b32.xlu0 %v1880, 125
    %v1904 = vpop.permute.xlu0 %1903
    %v1905 = vsel %vm297, %v1890, %v1892
    %v1906 = vsel %vm297, %v1894, %v1896
    %v1907 = vsel %vm297, %v1898, %v1900
    %v1908 = vsel %vm297, %v1902, %v1904
    %1913 = vst [vmem:[#allocation5 + $0x60] sm:$0xff] %v1905
    %1914 = vst [vmem:[#allocation5 + $0x68] sm:$0xff] %v1906
    %1915 = vst [vmem:[#allocation5 + $0x70] sm:$0xff] %v1907
    %1916 = vst [vmem:[#allocation5 + $0x78] sm:$0xff] %v1908
    %v1917 = vld [vmem:[#allocation3] sm:$0xff]
    %v1918 = vld [vmem:[#allocation3 + $0x8] sm:$0xff]
    %v1919 = vld [vmem:[#allocation3 + $0x10] sm:$0xff]
    %v1920 = vld [vmem:[#allocation3 + $0x18] sm:$0xff]
    %v1921 = vld [vmem:[#allocation3 + $0x20] sm:$0xff]
    %v1922 = vld [vmem:[#allocation3 + $0x28] sm:$0xff]
    %v1923 = vld [vmem:[#allocation3 + $0x30] sm:$0xff]
    %v1924 = vld [vmem:[#allocation3 + $0x38] sm:$0xff]
    %1933 = vrot.lane.b32.xlu0 %v1917, 124
    %v1934 = vpop.permute.xlu0 %1933
    %1935 = vrot.lane.b32.xlu0 %v1918, 124
    %v1936 = vpop.permute.xlu0 %1935
    %1937 = vrot.lane.b32.xlu0 %v1919, 124
    %v1938 = vpop.permute.xlu0 %1937
    %1939 = vrot.lane.b32.xlu0 %v1920, 124
    %v1940 = vpop.permute.xlu0 %1939
    %1941 = vrot.lane.b32.xlu0 %v1921, 124
    %v1942 = vpop.permute.xlu0 %1941
    %1943 = vrot.lane.b32.xlu0 %v1922, 124
    %v1944 = vpop.permute.xlu0 %1943
    %1945 = vrot.lane.b32.xlu0 %v1923, 124
    %v1946 = vpop.permute.xlu0 %1945
    %1947 = vrot.lane.b32.xlu0 %v1924, 124
    %v1948 = vpop.permute.xlu0 %1947
    %v1949 = vsel %vm358, %v1934, %v1936
    %v1950 = vsel %vm358, %v1938, %v1940
    %v1951 = vsel %vm358, %v1942, %v1944
    %v1952 = vsel %vm358, %v1946, %v1948
    %1957 = vst [vmem:[#allocation5 + $0x80] sm:$0xff] %v1949
    %1958 = vst [vmem:[#allocation5 + $0x88] sm:$0xff] %v1950
    %1959 = vst [vmem:[#allocation5 + $0x90] sm:$0xff] %v1951
    %1960 = vst [vmem:[#allocation5 + $0x98] sm:$0xff] %v1952
    %v1961 = vld [vmem:[#allocation3] sm:$0xff]
    %v1962 = vld [vmem:[#allocation3 + $0x8] sm:$0xff]
    %v1963 = vld [vmem:[#allocation3 + $0x10] sm:$0xff]
    %v1964 = vld [vmem:[#allocation3 + $0x18] sm:$0xff]
    %v1965 = vld [vmem:[#allocation3 + $0x20] sm:$0xff]
    %v1966 = vld [vmem:[#allocation3 + $0x28] sm:$0xff]
    %v1967 = vld [vmem:[#allocation3 + $0x30] sm:$0xff]
    %v1968 = vld [vmem:[#allocation3 + $0x38] sm:$0xff]
    %1977 = vrot.lane.b32.xlu0 %v1961, 123
    %v1978 = vpop.permute.xlu0 %1977
    %1979 = vrot.lane.b32.xlu0 %v1962, 123
    %v1980 = vpop.permute.xlu0 %1979
    %1981 = vrot.lane.b32.xlu0 %v1963, 123
    %v1982 = vpop.permute.xlu0 %1981
    %1983 = vrot.lane.b32.xlu0 %v1964, 123
    %v1984 = vpop.permute.xlu0 %1983
    %1985 = vrot.lane.b32.xlu0 %v1965, 123
    %v1986 = vpop.permute.xlu0 %1985
    %1987 = vrot.lane.b32.xlu0 %v1966, 123
    %v1988 = vpop.permute.xlu0 %1987
    %1989 = vrot.lane.b32.xlu0 %v1967, 123
    %v1990 = vpop.permute.xlu0 %1989
    %1991 = vrot.lane.b32.xlu0 %v1968, 123
    %v1992 = vpop.permute.xlu0 %1991
    %v1993 = vsel %vm419, %v1978, %v1980
    %v1994 = vsel %vm419, %v1982, %v1984
    %v1995 = vsel %vm419, %v1986, %v1988
    %v1996 = vsel %vm419, %v1990, %v1992
    %2001 = vst [vmem:[#allocation5 + $0xa0] sm:$0xff] %v1993
    %2002 = vst [vmem:[#allocation5 + $0xa8] sm:$0xff] %v1994
    %2003 = vst [vmem:[#allocation5 + $0xb0] sm:$0xff] %v1995
    %2004 = vst [vmem:[#allocation5 + $0xb8] sm:$0xff] %v1996
    %v2005 = vld [vmem:[#allocation3] sm:$0xff]
    %v2006 = vld [vmem:[#allocation3 + $0x8] sm:$0xff]
    %v2007 = vld [vmem:[#allocation3 + $0x10] sm:$0xff]
    %v2008 = vld [vmem:[#allocation3 + $0x18] sm:$0xff]
    %v2009 = vld [vmem:[#allocation3 + $0x20] sm:$0xff]
    %v2010 = vld [vmem:[#allocation3 + $0x28] sm:$0xff]
    %v2011 = vld [vmem:[#allocation3 + $0x30] sm:$0xff]
    %v2012 = vld [vmem:[#allocation3 + $0x38] sm:$0xff]
    %2021 = vrot.lane.b32.xlu0 %v2005, 122
    %v2022 = vpop.permute.xlu0 %2021
    %2023 = vrot.lane.b32.xlu0 %v2006, 122
    %v2024 = vpop.permute.xlu0 %2023
    %2025 = vrot.lane.b32.xlu0 %v2007, 122
    %v2026 = vpop.permute.xlu0 %2025
    %2027 = vrot.lane.b32.xlu0 %v2008, 122
    %v2028 = vpop.permute.xlu0 %2027
    %2029 = vrot.lane.b32.xlu0 %v2009, 122
    %v2030 = vpop.permute.xlu0 %2029
    %2031 = vrot.lane.b32.xlu0 %v2010, 122
    %v2032 = vpop.permute.xlu0 %2031
    %2033 = vrot.lane.b32.xlu0 %v2011, 122
    %v2034 = vpop.permute.xlu0 %2033
    %2035 = vrot.lane.b32.xlu0 %v2012, 122
    %v2036 = vpop.permute.xlu0 %2035
    %v2037 = vsel %vm480, %v2022, %v2024
    %v2038 = vsel %vm480, %v2026, %v2028
    %v2039 = vsel %vm480, %v2030, %v2032
    %v2040 = vsel %vm480, %v2034, %v2036
    %2045 = vst [vmem:[#allocation5 + $0xc0] sm:$0xff] %v2037
    %2046 = vst [vmem:[#allocation5 + $0xc8] sm:$0xff] %v2038
    %2047 = vst [vmem:[#allocation5 + $0xd0] sm:$0xff] %v2039
    %2048 = vst [vmem:[#allocation5 + $0xd8] sm:$0xff] %v2040
    %v2049 = vld [vmem:[%s2] sm:$0xff]
    %v2050 = vld [vmem:[%s2 + $0x8] sm:$0xff]
    %v2051 = vld [vmem:[%s2 + $0x10] sm:$0xff]
    %v2052 = vld [vmem:[%s2 + $0x18] sm:$0xff]
    %v2053 = vld [vmem:[%s2 + $0x20] sm:$0xff]
    %v2054 = vld [vmem:[%s2 + $0x28] sm:$0xff]
    %v2055 = vld [vmem:[%s2 + $0x30] sm:$0xff]
    %v2056 = vld [vmem:[%s2 + $0x38] sm:$0xff]
    %v2057 = vld [vmem:[#allocation5] sm:$0xff]
    %v2058 = vld [vmem:[#allocation5 + $0x8] sm:$0xff]
    %v2059 = vld [vmem:[#allocation5 + $0x10] sm:$0xff]
    %v2060 = vld [vmem:[#allocation5 + $0x18] sm:$0xff]
    %v2061 = vld [vmem:[#allocation5 + $0x20] sm:$0xff]
    %v2062 = vld [vmem:[#allocation5 + $0x28] sm:$0xff]
    %v2063 = vld [vmem:[#allocation5 + $0x30] sm:$0xff]
    %v2064 = vld [vmem:[#allocation5 + $0x38] sm:$0xff]
    %v2065 = vld [vmem:[#allocation5 + $0x40] sm:$0xff]
    %v2066 = vld [vmem:[#allocation5 + $0x48] sm:$0xff]
    %v2067 = vld [vmem:[#allocation5 + $0x50] sm:$0xff]
    %v2068 = vld [vmem:[#allocation5 + $0x58] sm:$0xff]
    %v2069 = vld [vmem:[#allocation5 + $0x60] sm:$0xff]
    %v2070 = vld [vmem:[#allocation5 + $0x68] sm:$0xff]
    %v2071 = vld [vmem:[#allocation5 + $0x70] sm:$0xff]
    %v2072 = vld [vmem:[#allocation5 + $0x78] sm:$0xff]
    %v2073 = vld [vmem:[#allocation5 + $0x80] sm:$0xff]
    %v2074 = vld [vmem:[#allocation5 + $0x88] sm:$0xff]
    %v2075 = vld [vmem:[#allocation5 + $0x90] sm:$0xff]
    %v2076 = vld [vmem:[#allocation5 + $0x98] sm:$0xff]
    %v2077 = vld [vmem:[#allocation5 + $0xa0] sm:$0xff]
    %v2078 = vld [vmem:[#allocation5 + $0xa8] sm:$0xff]
    %v2079 = vld [vmem:[#allocation5 + $0xb0] sm:$0xff]
    %v2080 = vld [vmem:[#allocation5 + $0xb8] sm:$0xff]
    %v2081 = vld [vmem:[#allocation5 + $0xc0] sm:$0xff]
    %v2082 = vld [vmem:[#allocation5 + $0xc8] sm:$0xff]
    %v2083 = vld [vmem:[#allocation5 + $0xd0] sm:$0xff]
    %v2084 = vld [vmem:[#allocation5 + $0xd8] sm:$0xff]
    %v2085 = vld [vmem:[#allocation5 + $0xe0] sm:$0xff]
    %v2086 = vld [vmem:[#allocation5 + $0xe8] sm:$0xff]
    %v2087 = vld [vmem:[#allocation5 + $0xf0] sm:$0xff]
    %v2088 = vld [vmem:[#allocation5 + $0xf8] sm:$0xff]
    %v2089 = vld [vmem:[%s4] sm:$0xff]
    %v2090 = vld [vmem:[%s4 + $0x8] sm:$0xff]
    %v2091 = vld [vmem:[%s4 + $0x10] sm:$0xff]
    %v2092 = vld [vmem:[%s4 + $0x18] sm:$0xff]
    %2094 = vset.pattern.permute.xlu0 1
    %2095 = vperm.xlu0 %2094, %v2089
    %v2096 = vpop.permute.xlu0 %2095
    %2099 = vset.pattern.permute.xlu0 1
    %2100 = vperm.xlu0 %2099, %v2090
    %v2101 = vpop.permute.xlu0 %2100
    %2104 = vset.pattern.permute.xlu0 1
    %2105 = vperm.xlu0 %2104, %v2091
    %v2106 = vpop.permute.xlu0 %2105
    %2109 = vset.pattern.permute.xlu0 1
    %2110 = vperm.xlu0 %2109, %v2092
    %v2111 = vpop.permute.xlu0 %2110
    %2113 = vmatprep.subr.mxu0 0.0
    %2114 = vmatpush1.msra.mxu0 %v2072
    %2115 = vmatprep.subr.mxu0 0.0
    %2116 = vmatpush1.msra.mxu0 %v2071
    %2117 = vmatprep.subr.mxu0 0.0
    %2118 = vmatpush1.msra.mxu0 %v2070
    %2119 = vmatprep.subr.mxu0 0.0
    %2120 = vmatpush1.msra.mxu0 %v2069
    %2121 = vmatprep.subr.mxu0 0.0
    %2122 = vmatpush1.msra.mxu0 %v2068
    %2123 = vmatprep.subr.mxu0 0.0
    %2124 = vmatpush1.msra.mxu0 %v2067
    %2125 = vmatprep.subr.mxu0 0.0
    %2126 = vmatpush1.msra.mxu0 %v2066
    %2127 = vmatprep.subr.mxu0 0.0
    %2128 = vmatpush1.msra.mxu0 %v2065
    %2129 = vmatprep.subr.mxu0 0.0
    %2130 = vmatpush1.msra.mxu0 %v2064
    %2131 = vmatprep.subr.mxu0 0.0
    %2132 = vmatpush1.msra.mxu0 %v2063
    %2133 = vmatprep.subr.mxu0 0.0
    %2134 = vmatpush1.msra.mxu0 %v2062
    %2135 = vmatprep.subr.mxu0 0.0
    %2136 = vmatpush1.msra.mxu0 %v2061
    %2137 = vmatprep.subr.mxu0 0.0
    %2138 = vmatpush1.msra.mxu0 %v2060
    %2139 = vmatprep.subr.mxu0 0.0
    %2140 = vmatpush1.msra.mxu0 %v2059
    %2141 = vmatprep.subr.mxu0 0.0
    %2142 = vmatpush1.msra.mxu0 %v2058
    %2143 = vmatprep.subr.mxu0 0.0
    %2144 = vmatpush1.msra.mxu0 %v2057
    %2145 = vmatprep.subr.mxu0 0.0
    %2146 = vmatpush2.msra.mxu0 %v2088
    %2147 = vmatprep.subr.mxu0 0.0
    %2148 = vmatpush2.msra.mxu0 %v2087
    %2149 = vmatprep.subr.mxu0 0.0
    %2150 = vmatpush2.msra.mxu0 %v2086
    %2151 = vmatprep.subr.mxu0 0.0
    %2152 = vmatpush2.msra.mxu0 %v2085
    %2153 = vmatprep.subr.mxu0 0.0
    %2154 = vmatpush2.msra.mxu0 %v2084
    %2155 = vmatprep.subr.mxu0 0.0
    %2156 = vmatpush2.msra.mxu0 %v2083
    %2157 = vmatprep.subr.mxu0 0.0
    %2158 = vmatpush2.msra.mxu0 %v2082
    %2159 = vmatprep.subr.mxu0 0.0
    %2160 = vmatpush2.msra.mxu0 %v2081
    %2161 = vmatprep.subr.mxu0 0.0
    %2162 = vmatpush2.msra.mxu0 %v2080
    %2163 = vmatprep.subr.mxu0 0.0
    %2164 = vmatpush2.msra.mxu0 %v2079
    %2165 = vmatprep.subr.mxu0 0.0
    %2166 = vmatpush2.msra.mxu0 %v2078
    %2167 = vmatprep.subr.mxu0 0.0
    %2168 = vmatpush2.msra.mxu0 %v2077
    %2169 = vmatprep.subr.mxu0 0.0
    %2170 = vmatpush2.msra.mxu0 %v2076
    %2171 = vmatprep.subr.mxu0 0.0
    %2172 = vmatpush2.msra.mxu0 %v2075
    %2173 = vmatprep.subr.mxu0 0.0
    %2174 = vmatpush2.msra.mxu0 %v2074
    %2175 = vmatprep.subr.mxu0 0.0
    %2176 = vmatpush2.msra.mxu0 %v2073
    %2177 = vmatprep.mubr.f32.mxu0 %v2050
    %2178 = vmatmul.mubr.f32.gmra.mxu0 %v2049
    %v2179 = vpop.f32.mrf.mxu0
    %v2180 = vadd.f32 %v2096, %v2179
    %v2181 = vpop.f32.mrf.mxu0
    %2182 = vmatprep.mubr.f32.mxu0 %v2052
    %2183 = vmatmul.mubr.f32.gmra.mxu0 %v2051
    %v2184 = vpop.f32.mrf.mxu0
    %v2185 = vadd.f32 %v2101, %v2184
    %v2186 = vpop.f32.mrf.mxu0
    %2187 = vmatprep.mubr.f32.mxu0 %v2054
    %2188 = vmatmul.mubr.f32.gmra.mxu0 %v2053
    %v2189 = vpop.f32.mrf.mxu0
    %v2190 = vadd.f32 %v2106, %v2189
    %v2191 = vpop.f32.mrf.mxu0
    %2192 = vmatprep.mubr.f32.mxu0 %v2056
    %2193 = vmatmul.mubr.f32.gmra.mxu0 %v2055
    %v2194 = vpop.f32.mrf.mxu0
    %v2195 = vadd.f32 %v2111, %v2194
    %v2196 = vpop.f32.mrf.mxu0
    %2197 = vdwg.mxu0
    %v2198 = vmax.f32 %v2180, 0.0
    %v2199 = vmax.f32 %v2185, 0.0
    %v2200 = vmax.f32 %v2190, 0.0
    %v2201 = vmax.f32 %v2195, 0.0
    %2206 = vrot.lane.b32.xlu0 %v2198, 3
    %v2207 = vpop.permute.xlu0 %2206
    %2208 = vrot.lane.b32.xlu0 %v2199, 3
    %v2209 = vpop.permute.xlu0 %2208
    %2210 = vrot.lane.b32.xlu0 %v2200, 3
    %v2211 = vpop.permute.xlu0 %2210
    %2212 = vrot.lane.b32.xlu0 %v2201, 3
    %v2213 = vpop.permute.xlu0 %2212
    %2218 = vst.msk [vmem:[#allocation4] sm:$0xff] %vm541, %v2207
    %2219 = vst.msk [vmem:[#allocation4 + $0x8] sm:$0xff] %vm30, %v2207
    %2220 = vst.msk [vmem:[#allocation4 + $0x10] sm:$0xff] %vm541, %v2209
    %2221 = vst.msk [vmem:[#allocation4 + $0x18] sm:$0xff] %vm30, %v2209
    %2222 = vst.msk [vmem:[#allocation4 + $0x20] sm:$0xff] %vm541, %v2211
    %2223 = vst.msk [vmem:[#allocation4 + $0x28] sm:$0xff] %vm30, %v2211
    %2224 = vst.msk [vmem:[#allocation4 + $0x30] sm:$0xff] %vm541, %v2213
    %2225 = vst.msk [vmem:[#allocation4 + $0x38] sm:$0xff] %vm30, %v2213
    %v2226 = vld [vmem:[#allocation4] sm:$0xff]
    %v2227 = vld [vmem:[#allocation4 + $0x10] sm:$0xff]
    %v2228 = vld [vmem:[#allocation4 + $0x20] sm:$0xff]
    %v2229 = vld [vmem:[#allocation4 + $0x30] sm:$0xff]
    %v2230 = vmul.f32 %v1006, %v2226
    %v2231 = vmul.f32 %v1011, %v2227
    %v2232 = vmul.f32 %v1016, %v2228
    %v2233 = vmul.f32 %v1021, %v2229
    %v2234 = vld [vmem:[#allocation4 + $0x8] sm:$0xff]
    %v2235 = vld [vmem:[#allocation4 + $0x18] sm:$0xff]
    %v2236 = vld [vmem:[#allocation4 + $0x28] sm:$0xff]
    %v2237 = vld [vmem:[#allocation4 + $0x38] sm:$0xff]
    %v2238 = vmul.f32 %v1037, %v2226
    %v2239 = vmul.f32 %v1037, %v2234
    %v2240 = vmul.f32 %v1041, %v2227
    %v2241 = vmul.f32 %v1041, %v2235
    %v2242 = vmul.f32 %v1045, %v2228
    %v2243 = vmul.f32 %v1045, %v2236
    %v2244 = vmul.f32 %v1049, %v2229
    %v2245 = vmul.f32 %v1049, %v2237
    %2254 = vrot.lane.b32.xlu0 %v2238, 127
    %v2255 = vpop.permute.xlu0 %2254
    %2256 = vrot.lane.b32.xlu0 %v2239, 127
    %v2257 = vpop.permute.xlu0 %2256
    %2258 = vrot.lane.b32.xlu0 %v2240, 127
    %v2259 = vpop.permute.xlu0 %2258
    %2260 = vrot.lane.b32.xlu0 %v2241, 127
    %v2261 = vpop.permute.xlu0 %2260
    %2262 = vrot.lane.b32.xlu0 %v2242, 127
    %v2263 = vpop.permute.xlu0 %2262
    %2264 = vrot.lane.b32.xlu0 %v2243, 127
    %v2265 = vpop.permute.xlu0 %2264
    %2266 = vrot.lane.b32.xlu0 %v2244, 127
    %v2267 = vpop.permute.xlu0 %2266
    %2268 = vrot.lane.b32.xlu0 %v2245, 127
    %v2269 = vpop.permute.xlu0 %2268
    %v2270 = vsel %vm175, %v2255, %v2257
    %v2271 = vsel %vm175, %v2259, %v2261
    %v2272 = vsel %vm175, %v2263, %v2265
    %v2273 = vsel %vm175, %v2267, %v2269
    %v2278 = vadd.f32 %v2230, %v2270
    %v2279 = vadd.f32 %v2231, %v2271
    %v2280 = vadd.f32 %v2232, %v2272
    %v2281 = vadd.f32 %v2233, %v2273
    %v2282 = vmul.f32 %v1097, %v2226
    %v2283 = vmul.f32 %v1097, %v2234
    %v2284 = vmul.f32 %v1101, %v2227
    %v2285 = vmul.f32 %v1101, %v2235
    %v2286 = vmul.f32 %v1105, %v2228
    %v2287 = vmul.f32 %v1105, %v2236
    %v2288 = vmul.f32 %v1109, %v2229
    %v2289 = vmul.f32 %v1109, %v2237
    %2298 = vrot.lane.b32.xlu0 %v2282, 126
    %v2299 = vpop.permute.xlu0 %2298
    %2300 = vrot.lane.b32.xlu0 %v2283, 126
    %v2301 = vpop.permute.xlu0 %2300
    %2302 = vrot.lane.b32.xlu0 %v2284, 126
    %v2303 = vpop.permute.xlu0 %2302
    %2304 = vrot.lane.b32.xlu0 %v2285, 126
    %v2305 = vpop.permute.xlu0 %2304
    %2306 = vrot.lane.b32.xlu0 %v2286, 126
    %v2307 = vpop.permute.xlu0 %2306
    %2308 = vrot.lane.b32.xlu0 %v2287, 126
    %v2309 = vpop.permute.xlu0 %2308
    %2310 = vrot.lane.b32.xlu0 %v2288, 126
    %v2311 = vpop.permute.xlu0 %2310
    %2312 = vrot.lane.b32.xlu0 %v2289, 126
    %v2313 = vpop.permute.xlu0 %2312
    %v2314 = vsel %vm236, %v2299, %v2301
    %v2315 = vsel %vm236, %v2303, %v2305
    %v2316 = vsel %vm236, %v2307, %v2309
    %v2317 = vsel %vm236, %v2311, %v2313
    %v2322 = vadd.f32 %v2278, %v2314
    %v2323 = vadd.f32 %v2279, %v2315
    %v2324 = vadd.f32 %v2280, %v2316
    %v2325 = vadd.f32 %v2281, %v2317
    %v2326 = vmul.f32 %v1157, %v2226
    %v2327 = vmul.f32 %v1157, %v2234
    %v2328 = vmul.f32 %v1161, %v2227
    %v2329 = vmul.f32 %v1161, %v2235
    %v2330 = vmul.f32 %v1165, %v2228
    %v2331 = vmul.f32 %v1165, %v2236
    %v2332 = vmul.f32 %v1169, %v2229
    %v2333 = vmul.f32 %v1169, %v2237
    %2342 = vrot.lane.b32.xlu0 %v2326, 125
    %v2343 = vpop.permute.xlu0 %2342
    %2344 = vrot.lane.b32.xlu0 %v2327, 125
    %v2345 = vpop.permute.xlu0 %2344
    %2346 = vrot.lane.b32.xlu0 %v2328, 125
    %v2347 = vpop.permute.xlu0 %2346
    %2348 = vrot.lane.b32.xlu0 %v2329, 125
    %v2349 = vpop.permute.xlu0 %2348
    %2350 = vrot.lane.b32.xlu0 %v2330, 125
    %v2351 = vpop.permute.xlu0 %2350
    %2352 = vrot.lane.b32.xlu0 %v2331, 125
    %v2353 = vpop.permute.xlu0 %2352
    %2354 = vrot.lane.b32.xlu0 %v2332, 125
    %v2355 = vpop.permute.xlu0 %2354
    %2356 = vrot.lane.b32.xlu0 %v2333, 125
    %v2357 = vpop.permute.xlu0 %2356
    %v2358 = vsel %vm297, %v2343, %v2345
    %v2359 = vsel %vm297, %v2347, %v2349
    %v2360 = vsel %vm297, %v2351, %v2353
    %v2361 = vsel %vm297, %v2355, %v2357
    %v2366 = vadd.f32 %v2322, %v2358
    %v2367 = vadd.f32 %v2323, %v2359
    %v2368 = vadd.f32 %v2324, %v2360
    %v2369 = vadd.f32 %v2325, %v2361
    %v2370 = vmul.f32 %v1217, %v2226
    %v2371 = vmul.f32 %v1217, %v2234
    %v2372 = vmul.f32 %v1221, %v2227
    %v2373 = vmul.f32 %v1221, %v2235
    %v2374 = vmul.f32 %v1225, %v2228
    %v2375 = vmul.f32 %v1225, %v2236
    %v2376 = vmul.f32 %v1229, %v2229
    %v2377 = vmul.f32 %v1229, %v2237
    %2386 = vrot.lane.b32.xlu0 %v2370, 124
    %v2387 = vpop.permute.xlu0 %2386
    %2388 = vrot.lane.b32.xlu0 %v2371, 124
    %v2389 = vpop.permute.xlu0 %2388
    %2390 = vrot.lane.b32.xlu0 %v2372, 124
    %v2391 = vpop.permute.xlu0 %2390
    %2392 = vrot.lane.b32.xlu0 %v2373, 124
    %v2393 = vpop.permute.xlu0 %2392
    %2394 = vrot.lane.b32.xlu0 %v2374, 124
    %v2395 = vpop.permute.xlu0 %2394
    %2396 = vrot.lane.b32.xlu0 %v2375, 124
    %v2397 = vpop.permute.xlu0 %2396
    %2398 = vrot.lane.b32.xlu0 %v2376, 124
    %v2399 = vpop.permute.xlu0 %2398
    %2400 = vrot.lane.b32.xlu0 %v2377, 124
    %v2401 = vpop.permute.xlu0 %2400
    %v2402 = vsel %vm358, %v2387, %v2389
    %v2403 = vsel %vm358, %v2391, %v2393
    %v2404 = vsel %vm358, %v2395, %v2397
    %v2405 = vsel %vm358, %v2399, %v2401
    %v2410 = vadd.f32 %v2366, %v2402
    %v2411 = vadd.f32 %v2367, %v2403
    %v2412 = vadd.f32 %v2368, %v2404
    %v2413 = vadd.f32 %v2369, %v2405
    %v2414 = vmul.f32 %v1277, %v2226
    %v2415 = vmul.f32 %v1277, %v2234
    %v2416 = vmul.f32 %v1281, %v2227
    %v2417 = vmul.f32 %v1281, %v2235
    %v2418 = vmul.f32 %v1285, %v2228
    %v2419 = vmul.f32 %v1285, %v2236
    %v2420 = vmul.f32 %v1289, %v2229
    %v2421 = vmul.f32 %v1289, %v2237
    %2430 = vrot.lane.b32.xlu0 %v2414, 123
    %v2431 = vpop.permute.xlu0 %2430
    %2432 = vrot.lane.b32.xlu0 %v2415, 123
    %v2433 = vpop.permute.xlu0 %2432
    %2434 = vrot.lane.b32.xlu0 %v2416, 123
    %v2435 = vpop.permute.xlu0 %2434
    %2436 = vrot.lane.b32.xlu0 %v2417, 123
    %v2437 = vpop.permute.xlu0 %2436
    %2438 = vrot.lane.b32.xlu0 %v2418, 123
    %v2439 = vpop.permute.xlu0 %2438
    %2440 = vrot.lane.b32.xlu0 %v2419, 123
    %v2441 = vpop.permute.xlu0 %2440
    %2442 = vrot.lane.b32.xlu0 %v2420, 123
    %v2443 = vpop.permute.xlu0 %2442
    %2444 = vrot.lane.b32.xlu0 %v2421, 123
    %v2445 = vpop.permute.xlu0 %2444
    %v2446 = vsel %vm419, %v2431, %v2433
    %v2447 = vsel %vm419, %v2435, %v2437
    %v2448 = vsel %vm419, %v2439, %v2441
    %v2449 = vsel %vm419, %v2443, %v2445
    %v2454 = vadd.f32 %v2410, %v2446
    %v2455 = vadd.f32 %v2411, %v2447
    %v2456 = vadd.f32 %v2412, %v2448
    %v2457 = vadd.f32 %v2413, %v2449
    %v2458 = vmul.f32 %v1337, %v2226
    %v2459 = vmul.f32 %v1337, %v2234
    %v2460 = vmul.f32 %v1341, %v2227
    %v2461 = vmul.f32 %v1341, %v2235
    %v2462 = vmul.f32 %v1345, %v2228
    %v2463 = vmul.f32 %v1345, %v2236
    %v2464 = vmul.f32 %v1349, %v2229
    %v2465 = vmul.f32 %v1349, %v2237
    %2474 = vrot.lane.b32.xlu0 %v2458, 122
    %v2475 = vpop.permute.xlu0 %2474
    %2476 = vrot.lane.b32.xlu0 %v2459, 122
    %v2477 = vpop.permute.xlu0 %2476
    %2478 = vrot.lane.b32.xlu0 %v2460, 122
    %v2479 = vpop.permute.xlu0 %2478
    %2480 = vrot.lane.b32.xlu0 %v2461, 122
    %v2481 = vpop.permute.xlu0 %2480
    %2482 = vrot.lane.b32.xlu0 %v2462, 122
    %v2483 = vpop.permute.xlu0 %2482
    %2484 = vrot.lane.b32.xlu0 %v2463, 122
    %v2485 = vpop.permute.xlu0 %2484
    %2486 = vrot.lane.b32.xlu0 %v2464, 122
    %v2487 = vpop.permute.xlu0 %2486
    %2488 = vrot.lane.b32.xlu0 %v2465, 122
    %v2489 = vpop.permute.xlu0 %2488
    %v2490 = vsel %vm480, %v2475, %v2477
    %v2491 = vsel %vm480, %v2479, %v2481
    %v2492 = vsel %vm480, %v2483, %v2485
    %v2493 = vsel %vm480, %v2487, %v2489
    %v2498 = vadd.f32 %v2454, %v2490
    %v2499 = vadd.f32 %v2455, %v2491
    %v2500 = vadd.f32 %v2456, %v2492
    %v2501 = vadd.f32 %v2457, %v2493
    %v2502 = vadd.f32 %v2498, %v2499
    %v2503 = vadd.f32 %v2502, %v2500
    %v2504 = vadd.f32 %v2503, %v2501
    %v2505 = vrot.slane %v2504, 4
    %v2506 = vadd.f32 %v2504, %v2505
    %v2507 = vrot.slane %v2506, 2
    %v2508 = vadd.f32 %v2506, %v2507
    %v2509 = vrot.slane %v2508, 1
    %v2510 = vadd.f32 %v2508, %v2509
    %v2511 = vld [vmem:[%s4] sm:$0x1]
    %2513 = vset.pattern.permute.xlu0 2
    %2514 = vperm.xlu0 %2513, %v2511
    %v2515 = vpop.permute.xlu0 %2514
    %v2517 = vadd.f32 %v2510, %v2515
    %2518 = vst [vmem:[#allocation6 + $0x1] sm:$0x1] %v2517
    // Predicated region
    $region22: #{tpu_custom_call.1} parent=1 // pred_check
      _
    $region23: #{tpu_custom_call.1} parent=1 // pred_check_branch
      %2520 = sbr.rel (0) target = $region25
    $region24: #{tpu_custom_call.1} parent=1 // pred_region
      %s2522 = ssub.s32 32, 32
      %2523 = vsyncadd [#allocation7], %s2522
      %s2525 = sshll.u32 [#allocation6], 4
      %s2526 = int_to_ptr.vmem [resolvable:$true] %s2525
      %2528 = dma.vmem_to_hbm [thread:$0]  %s2526, 32, %s5, [#allocation7]
    $region25: #{tpu_custom_call.1} parent=1 // pred_fallthru
      _
    // Predicated region
    $region26: #{tpu_custom_call.1} parent=1 // pred_check
      _
    $region27: #{tpu_custom_call.1} parent=1 // pred_check_branch
      %2530 = sbr.rel (0) target = $region29
    $region28: #{tpu_custom_call.1} parent=1 // pred_region
      %2531 = dma.done [#allocation7], 32
    $region29: #{tpu_custom_call.1} parent=1 // pred_fallthru
      _
    %2532 = vsyncpa [#allocation7], 1

</llo_original>
